<compile_context>
chip_gen: v5e
topology: v5e:2x2
jax: 0.10.0
libtpu: 0.0.40
codegen_flags: <defaults>
</compile_context>

<pallas_src>
import functools

import jax
import jax.numpy as jnp
from jax import lax
from jax.experimental import pallas as pl
from jax.experimental.pallas import tpu as pltpu

EPS = 1e-5
LANE = 128                       # TPU lane width: keep channel dims lane-dense
TM_TARGET = 512                  # rows per tile; small vs the 32 MiB VMEM budget
VMEM_LIMIT = 32 * 1024 * 1024    # explicit scoped-VMEM budget (safe on v7x 64 MiB)

_CPARAMS = pltpu.CompilerParams(
    dimension_semantics=("parallel",),   # independent M tiles -> megacore sharding
    vmem_limit_bytes=VMEM_LIMIT,
)


def _round_up(x, m):
    return (x + m - 1) // m * m


# ---------------------------------------------------------------------------
# Kernels
# ---------------------------------------------------------------------------
def conv_stats_kernel(p_ref, w_ref, z_ref, st_ref):
    """One M-tile of z = patches @ weights (bf16 operands, f32 MXU accumulate).

    Also writes this tile's per-channel partial sum / sum-of-squares (rows 0/1
    of an (8, Cp) stats block) so BatchNorm statistics can be reduced across
    tiles without re-reading z from HBM.  Each grid step writes a disjoint
    stats block, so the M grid axis stays "parallel"."""
    z = jnp.dot(p_ref[...], w_ref[...], preferred_element_type=jnp.float32)
    z_ref[...] = z
    s1 = jnp.sum(z, axis=0, keepdims=True)        # (1, Cp) channel sum
    s2 = jnp.sum(z * z, axis=0, keepdims=True)    # (1, Cp) channel sum of squares
    row = lax.broadcasted_iota(jnp.int32, st_ref.shape, 0)
    st_ref[...] = jnp.where(row == 0, s1, jnp.where(row == 1, s2, 0.0))


def bn_relu_kernel(z_ref, scale_ref, shift_ref, y_ref):
    """y = relu(z * scale + shift), emitted as bf16 for the next conv."""
    y = jnp.maximum(z_ref[...] * scale_ref[...] + shift_ref[...], 0.0)
    y_ref[...] = y.astype(y_ref.dtype)


def fuse_proj_kernel(z2_ref, sc2_ref, sh2_ref, zs_ref, scs_ref, shs_ref, o_ref):
    """out = relu(BN2(conv2) + BN_s(1x1 projection shortcut))."""
    main = z2_ref[...] * sc2_ref[...] + sh2_ref[...]
    short = zs_ref[...] * scs_ref[...] + shs_ref[...]
    o_ref[...] = jnp.maximum(main + short, 0.0)


def fuse_identity_kernel(z2_ref, sc2_ref, sh2_ref, x_ref, o_ref):
    """out = relu(BN2(conv2) + x)  (identity shortcut, no dummy weight DMAs)."""
    main = z2_ref[...] * sc2_ref[...] + sh2_ref[...]
    o_ref[...] = jnp.maximum(main + x_ref[...], 0.0)


# ---------------------------------------------------------------------------
# Tiled pallas_call wrappers
# ---------------------------------------------------------------------------
def _row_spec(tm, cp):
    return pl.BlockSpec((tm, cp), lambda i: (i, 0))


def _vec_spec(cp):
    return pl.BlockSpec((1, cp), lambda i: (0, 0))


def _conv_matmul(patches, weights, tm):
    """Tiled (Mp, K) @ (K, Cp) matmul with fused per-tile BN partial stats."""
    mp, kp = patches.shape
    cp = weights.shape[-1]
    g = mp // tm
    cost = pl.CostEstimate(
        flops=2 * mp * kp * cp,
        transcendentals=0,
        bytes_accessed=patches.size * 2 + weights.size * 2
        + mp * cp * 4 + g * 8 * cp * 4,
    )
    z, st = pl.pallas_call(
        conv_stats_kernel,
        grid=(g,),
        in_specs=[
            pl.BlockSpec((tm, kp), lambda i: (i, 0)),   # streamed M tiles
            pl.BlockSpec((kp, cp), lambda i: (0, 0)),   # weights stay resident
        ],
        out_specs=[
            pl.BlockSpec((tm, cp), lambda i: (i, 0)),
            pl.BlockSpec((8, cp), lambda i: (i, 0)),    # per-tile partial stats
        ],
        out_shape=[
            jax.ShapeDtypeStruct((mp, cp), jnp.float32),
            jax.ShapeDtypeStruct((g * 8, cp), jnp.float32),
        ],
        compiler_params=_CPARAMS,
        cost_estimate=cost,
    )(patches, weights)
    return z, st


def _bn_relu(z, scale, shift, tm):
    mp, cp = z.shape
    return pl.pallas_call(
        bn_relu_kernel,
        grid=(mp // tm,),
        in_specs=[_row_spec(tm, cp), _vec_spec(cp), _vec_spec(cp)],
        out_specs=_row_spec(tm, cp),
        out_shape=jax.ShapeDtypeStruct((mp, cp), jnp.bfloat16),
        compiler_params=_CPARAMS,
    )(z, scale, shift)


def _bn_scale_shift(stats, m_true, gamma, beta):
    """Fold per-tile partial sums into per-channel BN scale/shift (tiny)."""
    cp = stats.shape[-1]
    st = stats.reshape(-1, 8, cp)
    s1 = jnp.sum(st[:, 0, :], axis=0)
    s2 = jnp.sum(st[:, 1, :], axis=0)
    mean = s1 / m_true
    var = jnp.maximum(s2 / m_true - mean * mean, 0.0)     # biased variance
    scale = gamma * lax.rsqrt(var + EPS)
    shift = beta - mean * scale
    return scale.reshape(1, cp), shift.reshape(1, cp)


def _pad_gamma_beta(gamma, beta, cp):
    gamma = gamma.reshape(-1).astype(jnp.float32)
    beta = beta.reshape(-1).astype(jnp.float32)
    c = gamma.shape[0]
    return (jnp.pad(gamma, (0, cp - c), constant_values=1.0),
            jnp.pad(beta, (0, cp - c)))


# ---------------------------------------------------------------------------
# Plain-JAX glue: im2col (padding / strided patch extraction / reshape)
# ---------------------------------------------------------------------------
def _im2col(x_nhwc, k, stride):
    # TODO(synk): fuse conv1->conv2 inside one kernel with a haloed VMEM tile to
    # remove this HBM-materialized 9x patch copy (and the y1 round trip) entirely.
    n, h, w, c = x_nhwc.shape
    pad = (k - 1) // 2
    xp = jnp.pad(x_nhwc, ((0, 0), (pad, pad), (pad, pad), (0, 0)))
    h_out = (h + 2 * pad - k) // stride + 1
    w_out = (w + 2 * pad - k) // stride + 1
    cols = []
    for kh in range(k):
        for kw in range(k):
            sl = xp[:, kh:kh + (h_out - 1) * stride + 1:stride,
                       kw:kw + (w_out - 1) * stride + 1:stride, :]
            cols.append(sl)
    patches = jnp.concatenate(cols, axis=-1)          # (N, Hout, Wout, k*k*C)
    return patches.reshape(n * h_out * w_out, k * k * c), (n, h_out, w_out)


# ---------------------------------------------------------------------------
# Residual block wrapper
# ---------------------------------------------------------------------------
@functools.partial(jax.jit, static_argnums=(2,))
def residual_block(x_nchw, params, stride):
    x = jnp.transpose(x_nchw, (0, 2, 3, 1)).astype(jnp.float32)   # NCHW -> NHWC
    n, h, w, cin = x.shape
    cout = params["w1"].shape[-1]
    cp = _round_up(cout, LANE)               # lane-dense channel dim (zero pad)
    x_bf = x.astype(jnp.bfloat16)            # bf16 MXU operands, f32 accumulation

    # ---- conv1 (3x3, stride) + BN1 partial stats ----
    p1, (_, h1, w1_) = _im2col(x_bf, 3, stride)
    m = n * h1 * w1_
    tm = min(TM_TARGET, _round_up(m, 16))
    mp = _round_up(m, tm)
    k1 = p1.shape[-1]
    k1p = _round_up(k1, LANE)
    p1p = jnp.pad(p1, ((0, mp - m), (0, k1p - k1)))
    w1p = jnp.pad(params["w1"].reshape(k1, cout).astype(jnp.bfloat16),
                  ((0, k1p - k1), (0, cp - cout)))
    z1, st1 = _conv_matmul(p1p, w1p, tm)
    g1, b1 = _pad_gamma_beta(params["g1"], params["b1"], cp)
    sc1, sh1 = _bn_scale_shift(st1, m, g1, b1)

    # ---- BN1 + ReLU (tiled), emitted as bf16 for conv2 ----
    y1p = _bn_relu(z1, sc1, sh1, tm)
    y1 = y1p[:m].reshape(n, h1, w1_, cp)     # padded channels are exactly 0

    # ---- conv2 (3x3, stride 1) + BN2 partial stats ----
    p2, _ = _im2col(y1, 3, 1)                # (m, 9*cp): K already 128-aligned
    p2p = jnp.pad(p2, ((0, mp - m), (0, 0)))
    w2p = jnp.zeros((3, 3, cp, cp), jnp.bfloat16)
    w2p = w2p.at[:, :, :cout, :cout].set(params["w2"].astype(jnp.bfloat16))
    w2p = w2p.reshape(9 * cp, cp)
    z2, st2 = _conv_matmul(p2p, w2p, tm)
    g2, b2 = _pad_gamma_beta(params["g2"], params["b2"], cp)
    sc2, sh2 = _bn_scale_shift(st2, m, g2, b2)

    # ---- shortcut + fused BN2 + add + ReLU ----
    proj = (stride != 1) or (cin != cout)
    if proj:
        xs = x_bf[:, ::stride, ::stride, :].reshape(m, cin)
        ksp = _round_up(cin, LANE)
        xsp = jnp.pad(xs, ((0, mp - m), (0, ksp - cin)))
        wsp = jnp.pad(params["ws"].astype(jnp.bfloat16),
                      ((0, ksp - cin), (0, cp - cout)))
        zs, sts = _conv_matmul(xsp, wsp, tm)
        gs, bs = _pad_gamma_beta(params["gs"], params["bs"], cp)
        scs, shs = _bn_scale_shift(sts, m, gs, bs)
        out = pl.pallas_call(
            fuse_proj_kernel,
            grid=(mp // tm,),
            in_specs=[_row_spec(tm, cp), _vec_spec(cp), _vec_spec(cp),
                      _row_spec(tm, cp), _vec_spec(cp), _vec_spec(cp)],
            out_specs=_row_spec(tm, cp),
            out_shape=jax.ShapeDtypeStruct((mp, cp), jnp.float32),
            compiler_params=_CPARAMS,
        )(z2, sc2, sh2, zs, scs, shs)
    else:
        # identity shortcut (cin == cout, stride == 1): no dummy weight DMAs
        x_id = jnp.pad(x.reshape(m, cin), ((0, mp - m), (0, cp - cin)))
        out = pl.pallas_call(
            fuse_identity_kernel,
            grid=(mp // tm,),
            in_specs=[_row_spec(tm, cp), _vec_spec(cp), _vec_spec(cp),
                      _row_spec(tm, cp)],
            out_specs=_row_spec(tm, cp),
            out_shape=jax.ShapeDtypeStruct((mp, cp), jnp.float32),
            compiler_params=_CPARAMS,
        )(z2, sc2, sh2, x_id)

    out = out[:m, :cout].reshape(n, h1, w1_, cout)
    return jnp.transpose(out, (0, 3, 1, 2))  # NHWC -> NCHW


# ---------------------------------------------------------------------------
# Pure-JAX reference (correctness check)
# ---------------------------------------------------------------------------
def _bn_ref(z_nhwc, gamma, beta):
    gamma = gamma.reshape(1, 1, 1, -1)
    beta = beta.reshape(1, 1, 1, -1)
    mean = jnp.mean(z_nhwc, axis=(0, 1, 2), keepdims=True)
    var = jnp.mean((z_nhwc - mean) ** 2, axis=(0, 1, 2), keepdims=True)
    return (z_nhwc - mean) * lax.rsqrt(var + EPS) * gamma + beta


def residual_block_ref(x_nchw, params, stride, conv_dtype=jnp.float32):
    """Pure-JAX reference.  conv_dtype=bfloat16 mirrors the kernel's intentional
    MXU operand precision (accumulation stays f32) for a tight comparison."""
    x = jnp.transpose(x_nchw, (0, 2, 3, 1)).astype(jnp.float32)
    dn = ("NHWC", "HWIO", "NHWC")

    def conv(inp, wgt, s, pad):
        return lax.conv_general_dilated(
            inp.astype(conv_dtype), wgt.astype(conv_dtype), (s, s),
            ((pad, pad), (pad, pad)), dimension_numbers=dn,
            preferred_element_type=jnp.float32)

    y = conv(x, params["w1"], stride, 1)
    y = jax.nn.relu(_bn_ref(y, params["g1"], params["b1"]))
    y = conv(y, params["w2"], 1, 1)
    y = _bn_ref(y, params["g2"], params["b2"])
    cin, cout = x.shape[-1], params["w1"].shape[-1]
    if stride != 1 or cin != cout:
        ws = params["ws"].reshape(1, 1, cin, cout)
        sc = conv(x[:, ::stride, ::stride, :], ws, 1, 0)
        sc = _bn_ref(sc, params["gs"], params["bs"])
    else:
        sc = x
    out = jax.nn.relu(y + sc)
    return jnp.transpose(out, (0, 3, 1, 2))


# ---------------------------------------------------------------------------
if __name__ == "__main__":
    key = jax.random.PRNGKey(0)
    k_x, k_w1, k_w2, k_ws = jax.random.split(key, 4)

    N, Cin, H, W = 2, 4, 16, 16
    Cout, stride = 8, 2          # exercises the 1x1 projection shortcut

    x = jax.random.normal(k_x, (N, Cin, H, W), dtype=jnp.float32)
    params = {
        # conv weights in HWIO layout; 1x1 shortcut weight as (Cin, Cout)
        "w1": 0.1 * jax.random.normal(k_w1, (3, 3, Cin, Cout), dtype=jnp.float32),
        "w2": 0.1 * jax.random.normal(k_w2, (3, 3, Cout, Cout), dtype=jnp.float32),
        "ws": 0.1 * jax.random.normal(k_ws, (Cin, Cout), dtype=jnp.float32),
        # BatchNorm affine params (nn.BatchNorm2d default init: weight=1, bias=0)
        "g1": jnp.ones((Cout,), jnp.float32), "b1": jnp.zeros((Cout,), jnp.float32),
        "g2": jnp.ones((Cout,), jnp.float32), "b2": jnp.zeros((Cout,), jnp.float32),
        "gs": jnp.ones((Cout,), jnp.float32), "bs": jnp.zeros((Cout,), jnp.float32),
    }

    out = jax.block_until_ready(residual_block(x, params, stride))
    # Reference with the same bf16 conv-operand quantization (f32 accumulation),
    # so the comparison isolates structural correctness of the Pallas path.
    ref = jax.block_until_ready(
        residual_block_ref(x, params, stride, conv_dtype=jnp.bfloat16))

    assert out.shape == (N, Cout, H // stride, W // stride), out.shape
    max_err = float(jnp.max(jnp.abs(out - ref)))
    assert jnp.allclose(out, ref, atol=1e-2, rtol=1e-2), max_err
    print("KERNEL_OK")
</pallas_src>

<mosaic_0001>
module attributes {stable_mosaic.version = 11 : i64} {
  func.func @conv_stats_kernel(%arg0: i32, %arg1: memref<128x128xbf16, #tpu.memory_space<vmem>>, %arg2: memref<128x128xbf16, #tpu.memory_space<vmem>>, %arg3: memref<128x128xf32, #tpu.memory_space<vmem>>, %arg4: memref<8x128xf32, #tpu.memory_space<vmem>>) attributes {dimension_semantics = [#tpu.dimension_semantics<parallel>], iteration_bounds = array<i64: 1>, scalar_prefetch = 0 : i64, scratch_operands = 0 : i64, tpu.core_type = #tpu.core_type<tc>, window_params = [{transform_indices = @transform_0, window_bounds = array<i64: 128, 128>}, {pipeline_mode = #tpu.pipeline_mode<synchronous>, transform_indices = @transform_1, window_bounds = array<i64: 128, 128>}, {transform_indices = @transform_2, window_bounds = array<i64: 128, 128>}, {transform_indices = @transform_3, window_bounds = array<i64: 8, 128>}]} {
    %c0 = arith.constant 0 : index
    %c0_0 = arith.constant 0 : index
    %0 = vector.load %arg1[%c0, %c0_0] : memref<128x128xbf16, #tpu.memory_space<vmem>>, vector<128x128xbf16>
    %c0_1 = arith.constant 0 : index
    %c0_2 = arith.constant 0 : index
    %1 = vector.load %arg2[%c0_1, %c0_2] : memref<128x128xbf16, #tpu.memory_space<vmem>>, vector<128x128xbf16>
    %cst = arith.constant dense<0.000000e+00> : vector<128x128xf32>
    %2 = tpu.matmul %0, %1, %cst {dimension_numbers = #tpu.dot_dimension_numbers<[1], [0], [0], [1], [0, 0, 1, 1], [], []>} : vector<128x128xbf16>, vector<128x128xbf16>, vector<128x128xf32> -> vector<128x128xf32>
    %c0_3 = arith.constant 0 : index
    %c0_4 = arith.constant 0 : index
    %3 = vector.load %arg3[%c0_3, %c0_4] : memref<128x128xf32, #tpu.memory_space<vmem>>, vector<128x128xf32>
    tpu.vector_store %arg3[%c0_3, %c0_4], %2 {strides = array<i32>} : memref<128x128xf32, #tpu.memory_space<vmem>>, vector<128x128xf32>,
    %cst_5 = arith.constant dense<0.000000e+00> : vector<128xf32>
    %4 = vector.multi_reduction <add>, %2, %cst_5 [0] : vector<128x128xf32> to vector<128xf32>
    %5 = vector.shape_cast %4 : vector<128xf32> to vector<1x128xf32>
    %6 = arith.mulf %2, %2 : vector<128x128xf32>
    %cst_6 = arith.constant dense<0.000000e+00> : vector<128xf32>
    %7 = vector.multi_reduction <add>, %6, %cst_6 [0] : vector<128x128xf32> to vector<128xf32>
    %8 = vector.shape_cast %7 : vector<128xf32> to vector<1x128xf32>
    %9 = tpu.iota {dimensions = array<i32: 0>} : vector<8x128xi32>
    %c0_i32 = arith.constant 0 : i32
    %10 = vector.broadcast %c0_i32 : i32 to vector<8x128xi32>
    %11 = arith.cmpi eq, %9, %10 : vector<8x128xi32>
    %c1_i32 = arith.constant 1 : i32
    %12 = vector.broadcast %c1_i32 : i32 to vector<8x128xi32>
    %13 = arith.cmpi eq, %9, %12 : vector<8x128xi32>
    %cst_7 = arith.constant 0.000000e+00 : f32
    %14 = vector.shape_cast %8 : vector<1x128xf32> to vector<1x128xf32>
    %15 = vector.broadcast %14 : vector<1x128xf32> to vector<8x128xf32>
    %16 = vector.broadcast %cst_7 : f32 to vector<8x128xf32>
    %17 = arith.select %13, %15, %16 : vector<8x128xi1>, vector<8x128xf32>
    %18 = vector.shape_cast %5 : vector<1x128xf32> to vector<1x128xf32>
    %19 = vector.broadcast %18 : vector<1x128xf32> to vector<8x128xf32>
    %20 = arith.select %11, %19, %17 : vector<8x128xi1>, vector<8x128xf32>
    %c0_8 = arith.constant 0 : index
    %c0_9 = arith.constant 0 : index
    %21 = vector.load %arg4[%c0_8, %c0_9] : memref<8x128xf32, #tpu.memory_space<vmem>>, vector<8x128xf32>
    tpu.vector_store %arg4[%c0_8, %c0_9], %20 {strides = array<i32>} : memref<8x128xf32, #tpu.memory_space<vmem>>, vector<8x128xf32>,
    return
  }
  func.func @transform_0(%arg0: i32) -> (i32, i32) {
    %c0_i32 = arith.constant 0 : i32
    %c0_i32_0 = arith.constant 0 : i32
    return %arg0, %c0_i32 : i32, i32
  }
  func.func @transform_1(%arg0: i32) -> (i32, i32) {
    %c0_i32 = arith.constant 0 : i32
    %c0_i32_0 = arith.constant 0 : i32
    %c0_i32_1 = arith.constant 0 : i32
    return %c0_i32, %c0_i32_0 : i32, i32
  }
  func.func @transform_2(%arg0: i32) -> (i32, i32) {
    %c0_i32 = arith.constant 0 : i32
    %c0_i32_0 = arith.constant 0 : i32
    return %arg0, %c0_i32 : i32, i32
  }
  func.func @transform_3(%arg0: i32) -> (i32, i32) {
    %c0_i32 = arith.constant 0 : i32
    %c0_i32_0 = arith.constant 0 : i32
    return %arg0, %c0_i32 : i32, i32
  }
}

module attributes {stable_mosaic.version = 11 : i64} {
  func.func @bn_relu_kernel(%arg0: i32, %arg1: memref<128x128xf32, #tpu.memory_space<vmem>>, %arg2: memref<1x128xf32, #tpu.memory_space<vmem>>, %arg3: memref<1x128xf32, #tpu.memory_space<vmem>>, %arg4: memref<128x128xbf16, #tpu.memory_space<vmem>>) attributes {dimension_semantics = [#tpu.dimension_semantics<parallel>], iteration_bounds = array<i64: 1>, scalar_prefetch = 0 : i64, scratch_operands = 0 : i64, tpu.core_type = #tpu.core_type<tc>, window_params = [{transform_indices = @transform_0, window_bounds = array<i64: 128, 128>}, {pipeline_mode = #tpu.pipeline_mode<synchronous>, transform_indices = @transform_1, window_bounds = array<i64: 1, 128>}, {pipeline_mode = #tpu.pipeline_mode<synchronous>, transform_indices = @transform_2, window_bounds = array<i64: 1, 128>}, {transform_indices = @transform_3, window_bounds = array<i64: 128, 128>}]} {
    %c0 = arith.constant 0 : index
    %c0_0 = arith.constant 0 : index
    %0 = vector.load %arg1[%c0, %c0_0] : memref<128x128xf32, #tpu.memory_space<vmem>>, vector<128x128xf32>
    %c0_1 = arith.constant 0 : index
    %c0_2 = arith.constant 0 : index
    %1 = vector.load %arg2[%c0_1, %c0_2] : memref<1x128xf32, #tpu.memory_space<vmem>>, vector<1x128xf32>
    %2 = vector.broadcast %1 : vector<1x128xf32> to vector<128x128xf32>
    %3 = arith.mulf %0, %2 : vector<128x128xf32>
    %c0_3 = arith.constant 0 : index
    %c0_4 = arith.constant 0 : index
    %4 = vector.load %arg3[%c0_3, %c0_4] : memref<1x128xf32, #tpu.memory_space<vmem>>, vector<1x128xf32>
    %5 = vector.broadcast %4 : vector<1x128xf32> to vector<128x128xf32>
    %6 = arith.addf %3, %5 : vector<128x128xf32>
    %cst = arith.constant 0.000000e+00 : f32
    %7 = vector.broadcast %cst : f32 to vector<128x128xf32>
    %8 = arith.maximumf %6, %7 : vector<128x128xf32>
    %9 = arith.truncf %8 : vector<128x128xf32> to vector<128x128xbf16>
    %c0_5 = arith.constant 0 : index
    %c0_6 = arith.constant 0 : index
    %10 = vector.load %arg4[%c0_5, %c0_6] : memref<128x128xbf16, #tpu.memory_space<vmem>>, vector<128x128xbf16>
    tpu.vector_store %arg4[%c0_5, %c0_6], %9 {strides = array<i32>} : memref<128x128xbf16, #tpu.memory_space<vmem>>, vector<128x128xbf16>,
    return
  }
  func.func @transform_0(%arg0: i32) -> (i32, i32) {
    %c0_i32 = arith.constant 0 : i32
    %c0_i32_0 = arith.constant 0 : i32
    return %arg0, %c0_i32 : i32, i32
  }
  func.func @transform_1(%arg0: i32) -> (i32, i32) {
    %c0_i32 = arith.constant 0 : i32
    %c0_i32_0 = arith.constant 0 : i32
    %c0_i32_1 = arith.constant 0 : i32
    return %c0_i32, %c0_i32_0 : i32, i32
  }
  func.func @transform_2(%arg0: i32) -> (i32, i32) {
    %c0_i32 = arith.constant 0 : i32
    %c0_i32_0 = arith.constant 0 : i32
    %c0_i32_1 = arith.constant 0 : i32
    return %c0_i32, %c0_i32_0 : i32, i32
  }
  func.func @transform_3(%arg0: i32) -> (i32, i32) {
    %c0_i32 = arith.constant 0 : i32
    %c0_i32_0 = arith.constant 0 : i32
    return %arg0, %c0_i32 : i32, i32
  }
}

module attributes {stable_mosaic.version = 11 : i64} {
  func.func @conv_stats_kernel(%arg0: i32, %arg1: memref<128x1152xbf16, #tpu.memory_space<vmem>>, %arg2: memref<1152x128xbf16, #tpu.memory_space<vmem>>, %arg3: memref<128x128xf32, #tpu.memory_space<vmem>>, %arg4: memref<8x128xf32, #tpu.memory_space<vmem>>) attributes {dimension_semantics = [#tpu.dimension_semantics<parallel>], iteration_bounds = array<i64: 1>, scalar_prefetch = 0 : i64, scratch_operands = 0 : i64, tpu.core_type = #tpu.core_type<tc>, window_params = [{transform_indices = @transform_0, window_bounds = array<i64: 128, 1152>}, {pipeline_mode = #tpu.pipeline_mode<synchronous>, transform_indices = @transform_1, window_bounds = array<i64: 1152, 128>}, {transform_indices = @transform_2, window_bounds = array<i64: 128, 128>}, {transform_indices = @transform_3, window_bounds = array<i64: 8, 128>}]} {
    %c0 = arith.constant 0 : index
    %c0_0 = arith.constant 0 : index
    %0 = vector.load %arg1[%c0, %c0_0] : memref<128x1152xbf16, #tpu.memory_space<vmem>>, vector<128x1152xbf16>
    %c0_1 = arith.constant 0 : index
    %c0_2 = arith.constant 0 : index
    %1 = vector.load %arg2[%c0_1, %c0_2] : memref<1152x128xbf16, #tpu.memory_space<vmem>>, vector<1152x128xbf16>
    %cst = arith.constant dense<0.000000e+00> : vector<128x128xf32>
    %2 = tpu.matmul %0, %1, %cst {dimension_numbers = #tpu.dot_dimension_numbers<[1], [0], [0], [1], [0, 0, 1, 1], [], []>} : vector<128x1152xbf16>, vector<1152x128xbf16>, vector<128x128xf32> -> vector<128x128xf32>
    %c0_3 = arith.constant 0 : index
    %c0_4 = arith.constant 0 : index
    %3 = vector.load %arg3[%c0_3, %c0_4] : memref<128x128xf32, #tpu.memory_space<vmem>>, vector<128x128xf32>
    tpu.vector_store %arg3[%c0_3, %c0_4], %2 {strides = array<i32>} : memref<128x128xf32, #tpu.memory_space<vmem>>, vector<128x128xf32>,
    %cst_5 = arith.constant dense<0.000000e+00> : vector<128xf32>
    %4 = vector.multi_reduction <add>, %2, %cst_5 [0] : vector<128x128xf32> to vector<128xf32>
    %5 = vector.shape_cast %4 : vector<128xf32> to vector<1x128xf32>
    %6 = arith.mulf %2, %2 : vector<128x128xf32>
    %cst_6 = arith.constant dense<0.000000e+00> : vector<128xf32>
    %7 = vector.multi_reduction <add>, %6, %cst_6 [0] : vector<128x128xf32> to vector<128xf32>
    %8 = vector.shape_cast %7 : vector<128xf32> to vector<1x128xf32>
    %9 = tpu.iota {dimensions = array<i32: 0>} : vector<8x128xi32>
    %c0_i32 = arith.constant 0 : i32
    %10 = vector.broadcast %c0_i32 : i32 to vector<8x128xi32>
    %11 = arith.cmpi eq, %9, %10 : vector<8x128xi32>
    %c1_i32 = arith.constant 1 : i32
    %12 = vector.broadcast %c1_i32 : i32 to vector<8x128xi32>
    %13 = arith.cmpi eq, %9, %12 : vector<8x128xi32>
    %cst_7 = arith.constant 0.000000e+00 : f32
    %14 = vector.shape_cast %8 : vector<1x128xf32> to vector<1x128xf32>
    %15 = vector.broadcast %14 : vector<1x128xf32> to vector<8x128xf32>
    %16 = vector.broadcast %cst_7 : f32 to vector<8x128xf32>
    %17 = arith.select %13, %15, %16 : vector<8x128xi1>, vector<8x128xf32>
    %18 = vector.shape_cast %5 : vector<1x128xf32> to vector<1x128xf32>
    %19 = vector.broadcast %18 : vector<1x128xf32> to vector<8x128xf32>
    %20 = arith.select %11, %19, %17 : vector<8x128xi1>, vector<8x128xf32>
    %c0_8 = arith.constant 0 : index
    %c0_9 = arith.constant 0 : index
    %21 = vector.load %arg4[%c0_8, %c0_9] : memref<8x128xf32, #tpu.memory_space<vmem>>, vector<8x128xf32>
    tpu.vector_store %arg4[%c0_8, %c0_9], %20 {strides = array<i32>} : memref<8x128xf32, #tpu.memory_space<vmem>>, vector<8x128xf32>,
    return
  }
  func.func @transform_0(%arg0: i32) -> (i32, i32) {
    %c0_i32 = arith.constant 0 : i32
    %c0_i32_0 = arith.constant 0 : i32
    return %arg0, %c0_i32 : i32, i32
  }
  func.func @transform_1(%arg0: i32) -> (i32, i32) {
    %c0_i32 = arith.constant 0 : i32
    %c0_i32_0 = arith.constant 0 : i32
    %c0_i32_1 = arith.constant 0 : i32
    return %c0_i32, %c0_i32_0 : i32, i32
  }
  func.func @transform_2(%arg0: i32) -> (i32, i32) {
    %c0_i32 = arith.constant 0 : i32
    %c0_i32_0 = arith.constant 0 : i32
    return %arg0, %c0_i32 : i32, i32
  }
  func.func @transform_3(%arg0: i32) -> (i32, i32) {
    %c0_i32 = arith.constant 0 : i32
    %c0_i32_0 = arith.constant 0 : i32
    return %arg0, %c0_i32 : i32, i32
  }
}

module attributes {stable_mosaic.version = 11 : i64} {
  func.func @fuse_proj_kernel(%arg0: i32, %arg1: memref<128x128xf32, #tpu.memory_space<vmem>>, %arg2: memref<1x128xf32, #tpu.memory_space<vmem>>, %arg3: memref<1x128xf32, #tpu.memory_space<vmem>>, %arg4: memref<128x128xf32, #tpu.memory_space<vmem>>, %arg5: memref<1x128xf32, #tpu.memory_space<vmem>>, %arg6: memref<1x128xf32, #tpu.memory_space<vmem>>, %arg7: memref<128x128xf32, #tpu.memory_space<vmem>>) attributes {dimension_semantics = [#tpu.dimension_semantics<parallel>], iteration_bounds = array<i64: 1>, scalar_prefetch = 0 : i64, scratch_operands = 0 : i64, tpu.core_type = #tpu.core_type<tc>, window_params = [{transform_indices = @transform_0, window_bounds = array<i64: 128, 128>}, {pipeline_mode = #tpu.pipeline_mode<synchronous>, transform_indices = @transform_1, window_bounds = array<i64: 1, 128>}, {pipeline_mode = #tpu.pipeline_mode<synchronous>, transform_indices = @transform_2, window_bounds = array<i64: 1, 128>}, {transform_indices = @transform_3, window_bounds = array<i64: 128, 128>}, {pipeline_mode = #tpu.pipeline_mode<synchronous>, transform_indices = @transform_4, window_bounds = array<i64: 1, 128>}, {pipeline_mode = #tpu.pipeline_mode<synchronous>, transform_indices = @transform_5, window_bounds = array<i64: 1, 128>}, {transform_indices = @transform_6, window_bounds = array<i64: 128, 128>}]} {
    %c0 = arith.constant 0 : index
    %c0_0 = arith.constant 0 : index
    %0 = vector.load %arg1[%c0, %c0_0] : memref<128x128xf32, #tpu.memory_space<vmem>>, vector<128x128xf32>
    %c0_1 = arith.constant 0 : index
    %c0_2 = arith.constant 0 : index
    %1 = vector.load %arg2[%c0_1, %c0_2] : memref<1x128xf32, #tpu.memory_space<vmem>>, vector<1x128xf32>
    %2 = vector.broadcast %1 : vector<1x128xf32> to vector<128x128xf32>
    %3 = arith.mulf %0, %2 : vector<128x128xf32>
    %c0_3 = arith.constant 0 : index
    %c0_4 = arith.constant 0 : index
    %4 = vector.load %arg3[%c0_3, %c0_4] : memref<1x128xf32, #tpu.memory_space<vmem>>, vector<1x128xf32>
    %5 = vector.broadcast %4 : vector<1x128xf32> to vector<128x128xf32>
    %6 = arith.addf %3, %5 : vector<128x128xf32>
    %c0_5 = arith.constant 0 : index
    %c0_6 = arith.constant 0 : index
    %7 = vector.load %arg4[%c0_5, %c0_6] : memref<128x128xf32, #tpu.memory_space<vmem>>, vector<128x128xf32>
    %c0_7 = arith.constant 0 : index
    %c0_8 = arith.constant 0 : index
    %8 = vector.load %arg5[%c0_7, %c0_8] : memref<1x128xf32, #tpu.memory_space<vmem>>, vector<1x128xf32>
    %9 = vector.broadcast %8 : vector<1x128xf32> to vector<128x128xf32>
    %10 = arith.mulf %7, %9 : vector<128x128xf32>
    %c0_9 = arith.constant 0 : index
    %c0_10 = arith.constant 0 : index
    %11 = vector.load %arg6[%c0_9, %c0_10] : memref<1x128xf32, #tpu.memory_space<vmem>>, vector<1x128xf32>
    %12 = vector.broadcast %11 : vector<1x128xf32> to vector<128x128xf32>
    %13 = arith.addf %10, %12 : vector<128x128xf32>
    %14 = arith.addf %6, %13 : vector<128x128xf32>
    %cst = arith.constant 0.000000e+00 : f32
    %15 = vector.broadcast %cst : f32 to vector<128x128xf32>
    %16 = arith.maximumf %14, %15 : vector<128x128xf32>
    %c0_11 = arith.constant 0 : index
    %c0_12 = arith.constant 0 : index
    %17 = vector.load %arg7[%c0_11, %c0_12] : memref<128x128xf32, #tpu.memory_space<vmem>>, vector<128x128xf32>
    tpu.vector_store %arg7[%c0_11, %c0_12], %16 {strides = array<i32>} : memref<128x128xf32, #tpu.memory_space<vmem>>, vector<128x128xf32>,
    return
  }
  func.func @transform_0(%arg0: i32) -> (i32, i32) {
    %c0_i32 = arith.constant 0 : i32
    %c0_i32_0 = arith.constant 0 : i32
    return %arg0, %c0_i32 : i32, i32
  }
  func.func @transform_1(%arg0: i32) -> (i32, i32) {
    %c0_i32 = arith.constant 0 : i32
    %c0_i32_0 = arith.constant 0 : i32
    %c0_i32_1 = arith.constant 0 : i32
    return %c0_i32, %c0_i32_0 : i32, i32
  }
  func.func @transform_2(%arg0: i32) -> (i32, i32) {
    %c0_i32 = arith.constant 0 : i32
    %c0_i32_0 = arith.constant 0 : i32
    %c0_i32_1 = arith.constant 0 : i32
    return %c0_i32, %c0_i32_0 : i32, i32
  }
  func.func @transform_3(%arg0: i32) -> (i32, i32) {
    %c0_i32 = arith.constant 0 : i32
    %c0_i32_0 = arith.constant 0 : i32
    return %arg0, %c0_i32 : i32, i32
  }
  func.func @transform_4(%arg0: i32) -> (i32, i32) {
    %c0_i32 = arith.constant 0 : i32
    %c0_i32_0 = arith.constant 0 : i32
    %c0_i32_1 = arith.constant 0 : i32
    return %c0_i32, %c0_i32_0 : i32, i32
  }
  func.func @transform_5(%arg0: i32) -> (i32, i32) {
    %c0_i32 = arith.constant 0 : i32
    %c0_i32_0 = arith.constant 0 : i32
    %c0_i32_1 = arith.constant 0 : i32
    return %c0_i32, %c0_i32_0 : i32, i32
  }
  func.func @transform_6(%arg0: i32) -> (i32, i32) {
    %c0_i32 = arith.constant 0 : i32
    %c0_i32_0 = arith.constant 0 : i32
    return %arg0, %c0_i32 : i32, i32
  }
}

</mosaic_0001>

<llo_original>
// kernel: residual_block.6
$region0: #{residual_block.6}
  #allocation0 [shape = 'u32[]', space=smem, size = 0x4, offset = 0x4, fixed_abs, tag = 'smem constant byte address 0x4 - core index']
  #allocation1 [shape = 'u32[72,128]{1,0:T(1,128)}', space=vmem, size = 0x9000, scoped, tag = 'internal scratch']
  %s0 = inlined_call_operand.vmem [shape: f32[128,128], index: 0, kind: input, shape index: {}]
  %s1 = inlined_call_operand.vmem [shape: f32[1,128], index: 1, kind: input, shape index: {}]
  %s2 = inlined_call_operand.vmem [shape: f32[1,128], index: 2, kind: input, shape index: {}]
  %s3 = inlined_call_operand.vmem [shape: bf16[128,128], index: 3, kind: output, shape index: {}]
  %s4 = sld [smem:[#allocation0]]
  $region22: #{residual_block.6} parent=0
    _
  %s6 = ssub.s32 1, %s4
  %s7 = scalar_select 0, %s6, %s4
  // Predicated region
  $region2: #{residual_block.6} parent=0 // pred_check
    _
  $region3: #{residual_block.6} parent=0 // pred_check_branch
    %9 = sbr.rel (0) target = $region5
  $region4: #{residual_block.6} parent=0 // pred_region
    _
  $region5: #{residual_block.6} parent=0 // pred_fallthru
    _
  // Predicated region
  $region6: #{residual_block.6} parent=0 // pred_check
    _
  $region7: #{residual_block.6} parent=0 // pred_check_branch
    %11 = sbr.rel (0) target = $region9
  $region8: #{residual_block.6} parent=0 // pred_region
    _
  $region9: #{residual_block.6} parent=0 // pred_fallthru
    _
  // Predicated region
  $region10: #{residual_block.6} parent=0 // pred_check
    _
  $region11: #{residual_block.6} parent=0 // pred_check_branch
    %13 = sbr.rel (0) target = $region13
  $region12: #{residual_block.6} parent=0 // pred_region
    _
  $region13: #{residual_block.6} parent=0 // pred_fallthru
    _
  %v14 = vld [vmem:[%s0] sm:$0xff]
  %v15 = vld [vmem:[%s0 + $0x8] sm:$0xff]
  %v16 = vld [vmem:[%s0 + $0x10] sm:$0xff]
  %v17 = vld [vmem:[%s0 + $0x18] sm:$0xff]
  %v18 = vld [vmem:[%s0 + $0x20] sm:$0xff]
  %v19 = vld [vmem:[%s0 + $0x28] sm:$0xff]
  %v20 = vld [vmem:[%s0 + $0x30] sm:$0xff]
  %v21 = vld [vmem:[%s0 + $0x38] sm:$0xff]
  %v22 = vld [vmem:[%s0 + $0x40] sm:$0xff]
  %v23 = vld [vmem:[%s0 + $0x48] sm:$0xff]
  %v24 = vld [vmem:[%s0 + $0x50] sm:$0xff]
  %v25 = vld [vmem:[%s0 + $0x58] sm:$0xff]
  %v26 = vld [vmem:[%s0 + $0x60] sm:$0xff]
  %v27 = vld [vmem:[%s0 + $0x68] sm:$0xff]
  %v28 = vld [vmem:[%s0 + $0x70] sm:$0xff]
  %v29 = vld [vmem:[%s0 + $0x78] sm:$0xff]
  %v30 = vld [vmem:[%s1] sm:$0x1]
  %v32 = vperm.slane %v30, 0
  %v34 = vmul.f32 %v14, %v32
  %v35 = vmul.f32 %v15, %v32
  %v36 = vmul.f32 %v16, %v32
  %v37 = vmul.f32 %v17, %v32
  %v38 = vmul.f32 %v18, %v32
  %v39 = vmul.f32 %v19, %v32
  %v40 = vmul.f32 %v20, %v32
  %v41 = vmul.f32 %v21, %v32
  %v42 = vmul.f32 %v22, %v32
  %v43 = vmul.f32 %v23, %v32
  %v44 = vmul.f32 %v24, %v32
  %v45 = vmul.f32 %v25, %v32
  %v46 = vmul.f32 %v26, %v32
  %v47 = vmul.f32 %v27, %v32
  %v48 = vmul.f32 %v28, %v32
  %v49 = vmul.f32 %v29, %v32
  %v50 = vld [vmem:[%s2] sm:$0x1]
  %v52 = vperm.slane %v50, 0
  %v54 = vadd.f32 %v34, %v52
  %v55 = vadd.f32 %v35, %v52
  %v56 = vadd.f32 %v36, %v52
  %v57 = vadd.f32 %v37, %v52
  %v58 = vadd.f32 %v38, %v52
  %v59 = vadd.f32 %v39, %v52
  %v60 = vadd.f32 %v40, %v52
  %v61 = vadd.f32 %v41, %v52
  %v62 = vadd.f32 %v42, %v52
  %v63 = vadd.f32 %v43, %v52
  %v64 = vadd.f32 %v44, %v52
  %v65 = vadd.f32 %v45, %v52
  %v66 = vadd.f32 %v46, %v52
  %v67 = vadd.f32 %v47, %v52
  %v68 = vadd.f32 %v48, %v52
  %v69 = vadd.f32 %v49, %v52
  %v70 = vmax.f32 %v54, 0.0
  %v71 = vmax.f32 %v55, 0.0
  %v72 = vmax.f32 %v56, 0.0
  %v73 = vmax.f32 %v57, 0.0
  %v74 = vmax.f32 %v58, 0.0
  %v75 = vmax.f32 %v59, 0.0
  %v76 = vmax.f32 %v60, 0.0
  %v77 = vmax.f32 %v61, 0.0
  %v78 = vmax.f32 %v62, 0.0
  %v79 = vmax.f32 %v63, 0.0
  %v80 = vmax.f32 %v64, 0.0
  %v81 = vmax.f32 %v65, 0.0
  %v82 = vmax.f32 %v66, 0.0
  %v83 = vmax.f32 %v67, 0.0
  %v84 = vmax.f32 %v68, 0.0
  %v85 = vmax.f32 %v69, 0.0
  %v86 = vpack.c.bf16 %v70, %v70
  %v87 = vpack.c.bf16 %v71, %v71
  %v88 = vpack.c.bf16 %v72, %v72
  %v89 = vpack.c.bf16 %v73, %v73
  %v90 = vpack.c.bf16 %v74, %v74
  %v91 = vpack.c.bf16 %v75, %v75
  %v92 = vpack.c.bf16 %v76, %v76
  %v93 = vpack.c.bf16 %v77, %v77
  %v94 = vpack.c.bf16 %v78, %v78
  %v95 = vpack.c.bf16 %v79, %v79
  %v96 = vpack.c.bf16 %v80, %v80
  %v97 = vpack.c.bf16 %v81, %v81
  %v98 = vpack.c.bf16 %v82, %v82
  %v99 = vpack.c.bf16 %v83, %v83
  %v100 = vpack.c.bf16 %v84, %v84
  %v101 = vpack.c.bf16 %v85, %v85
  %102 = vst [vmem:[%s3] sm:$0xf] %v86
  %103 = vst [vmem:[%s3 + $0x4] sm:$0xf] %v87
  %104 = vst [vmem:[%s3 + $0x8] sm:$0xf] %v88
  %105 = vst [vmem:[%s3 + $0xc] sm:$0xf] %v89
  %106 = vst [vmem:[%s3 + $0x10] sm:$0xf] %v90
  %107 = vst [vmem:[%s3 + $0x14] sm:$0xf] %v91
  %108 = vst [vmem:[%s3 + $0x18] sm:$0xf] %v92
  %109 = vst [vmem:[%s3 + $0x1c] sm:$0xf] %v93
  %110 = vst [vmem:[%s3 + $0x20] sm:$0xf] %v94
  %111 = vst [vmem:[%s3 + $0x24] sm:$0xf] %v95
  %112 = vst [vmem:[%s3 + $0x28] sm:$0xf] %v96
  %113 = vst [vmem:[%s3 + $0x2c] sm:$0xf] %v97
  %114 = vst [vmem:[%s3 + $0x30] sm:$0xf] %v98
  %115 = vst [vmem:[%s3 + $0x34] sm:$0xf] %v99
  %116 = vst [vmem:[%s3 + $0x38] sm:$0xf] %v100
  %117 = vst [vmem:[%s3 + $0x3c] sm:$0xf] %v101
  // Predicated region
  $region14: #{residual_block.6} parent=0 // pred_check
    _
  $region15: #{residual_block.6} parent=0 // pred_check_branch
    %119 = sbr.rel (0) target = $region17
  $region16: #{residual_block.6} parent=0 // pred_region
    _
  $region17: #{residual_block.6} parent=0 // pred_fallthru
    _
  // Predicated region
  $region18: #{residual_block.6} parent=0 // pred_check
    _
  $region19: #{residual_block.6} parent=0 // pred_check_branch
    %121 = sbr.rel (0) target = $region21
  $region20: #{residual_block.6} parent=0 // pred_region
    _
  $region21: #{residual_block.6} parent=0 // pred_fallthru
    _

// kernel: residual_block.5
$region0: #{residual_block.5}
  #allocation0 [shape = 'u32[]', space=smem, size = 0x4, offset = 0x4, fixed_abs, tag = 'smem constant byte address 0x4 - core index']
  #allocation1 [shape = 'u32[72,128]{1,0:T(1,128)}', space=vmem, size = 0x9000, scoped, tag = 'internal scratch']
  %s0 = inlined_call_operand.vmem [shape: bf16[128,128], index: 0, kind: input, shape index: {}]
  %s1 = inlined_call_operand.vmem [shape: bf16[128,128], index: 1, kind: input, shape index: {}]
  %s2 = inlined_call_operand.vmem [shape: f32[128,128], index: 2, kind: output, shape index: {0}]
  %s3 = inlined_call_operand.vmem [shape: f32[8,128], index: 3, kind: output, shape index: {1}]
  %4 = xla_tuple %s2, %s3
  %s5 = sld [smem:[#allocation0]]
  $region26: #{residual_block.5} parent=0
    _
  %s7 = ssub.s32 1, %s5
  %s8 = scalar_select 0, %s7, %s5
  // Predicated region
  $region2: #{residual_block.5} parent=0 // pred_check
    _
  $region3: #{residual_block.5} parent=0 // pred_check_branch
    %10 = sbr.rel (0) target = $region5
  $region4: #{residual_block.5} parent=0 // pred_region
    _
  $region5: #{residual_block.5} parent=0 // pred_fallthru
    _
  // Predicated region
  $region6: #{residual_block.5} parent=0 // pred_check
    _
  $region7: #{residual_block.5} parent=0 // pred_check_branch
    %12 = sbr.rel (0) target = $region9
  $region8: #{residual_block.5} parent=0 // pred_region
    _
  $region9: #{residual_block.5} parent=0 // pred_fallthru
    _
  %v13 = vld [vmem:[%s0] sm:$0xf]
  %v14 = vld [vmem:[%s0 + $0x4] sm:$0xf]
  %v15 = vld [vmem:[%s0 + $0x8] sm:$0xf]
  %v16 = vld [vmem:[%s0 + $0xc] sm:$0xf]
  %v17 = vld [vmem:[%s0 + $0x10] sm:$0xf]
  %v18 = vld [vmem:[%s0 + $0x14] sm:$0xf]
  %v19 = vld [vmem:[%s0 + $0x18] sm:$0xf]
  %v20 = vld [vmem:[%s0 + $0x1c] sm:$0xf]
  %v21 = vld [vmem:[%s0 + $0x20] sm:$0xf]
  %v22 = vld [vmem:[%s0 + $0x24] sm:$0xf]
  %v23 = vld [vmem:[%s0 + $0x28] sm:$0xf]
  %v24 = vld [vmem:[%s0 + $0x2c] sm:$0xf]
  %v25 = vld [vmem:[%s0 + $0x30] sm:$0xf]
  %v26 = vld [vmem:[%s0 + $0x34] sm:$0xf]
  %v27 = vld [vmem:[%s0 + $0x38] sm:$0xf]
  %v28 = vld [vmem:[%s0 + $0x3c] sm:$0xf]
  %v29 = vld [vmem:[%s1] sm:$0xf]
  %v30 = vld [vmem:[%s1 + $0x4] sm:$0xf]
  %v31 = vld [vmem:[%s1 + $0x8] sm:$0xf]
  %v32 = vld [vmem:[%s1 + $0xc] sm:$0xf]
  %v33 = vld [vmem:[%s1 + $0x10] sm:$0xf]
  %v34 = vld [vmem:[%s1 + $0x14] sm:$0xf]
  %v35 = vld [vmem:[%s1 + $0x18] sm:$0xf]
  %v36 = vld [vmem:[%s1 + $0x1c] sm:$0xf]
  %v37 = vld [vmem:[%s1 + $0x20] sm:$0xf]
  %v38 = vld [vmem:[%s1 + $0x24] sm:$0xf]
  %v39 = vld [vmem:[%s1 + $0x28] sm:$0xf]
  %v40 = vld [vmem:[%s1 + $0x2c] sm:$0xf]
  %v41 = vld [vmem:[%s1 + $0x30] sm:$0xf]
  %v42 = vld [vmem:[%s1 + $0x34] sm:$0xf]
  %v43 = vld [vmem:[%s1 + $0x38] sm:$0xf]
  %v44 = vld [vmem:[%s1 + $0x3c] sm:$0xf]
  %v61 = vunpack.c.l.b16 %v13
  %v62 = vunpack.c.l.b16 %v14
  %v63 = vunpack.c.l.b16 %v15
  %v64 = vunpack.c.l.b16 %v16
  %v65 = vunpack.c.l.b16 %v17
  %v66 = vunpack.c.l.b16 %v18
  %v67 = vunpack.c.l.b16 %v19
  %v68 = vunpack.c.l.b16 %v20
  %v69 = vunpack.c.l.b16 %v21
  %v70 = vunpack.c.l.b16 %v22
  %v71 = vunpack.c.l.b16 %v23
  %v72 = vunpack.c.l.b16 %v24
  %v73 = vunpack.c.l.b16 %v25
  %v74 = vunpack.c.l.b16 %v26
  %v75 = vunpack.c.l.b16 %v27
  %v76 = vunpack.c.l.b16 %v28
  %v77 = vpack.c.b16 %v62, %v61
  %v78 = vpack.c.b16 %v64, %v63
  %v79 = vpack.c.b16 %v66, %v65
  %v80 = vpack.c.b16 %v68, %v67
  %v81 = vpack.c.b16 %v70, %v69
  %v82 = vpack.c.b16 %v72, %v71
  %v83 = vpack.c.b16 %v74, %v73
  %v84 = vpack.c.b16 %v76, %v75
  %v109 = vunpack.c.l.b16 %v29
  %v110 = vunpack.c.l.b16 %v30
  %v111 = vunpack.c.l.b16 %v31
  %v112 = vunpack.c.l.b16 %v32
  %v113 = vunpack.c.l.b16 %v33
  %v114 = vunpack.c.l.b16 %v34
  %v115 = vunpack.c.l.b16 %v35
  %v116 = vunpack.c.l.b16 %v36
  %v117 = vunpack.c.l.b16 %v37
  %v118 = vunpack.c.l.b16 %v38
  %v119 = vunpack.c.l.b16 %v39
  %v120 = vunpack.c.l.b16 %v40
  %v121 = vunpack.c.l.b16 %v41
  %v122 = vunpack.c.l.b16 %v42
  %v123 = vunpack.c.l.b16 %v43
  %v124 = vunpack.c.l.b16 %v44
  %v125 = vpack.c.b16 %v110, %v109
  %v126 = vpack.c.b16 %v112, %v111
  %v127 = vpack.c.b16 %v114, %v113
  %v128 = vpack.c.b16 %v116, %v115
  %v129 = vpack.c.b16 %v118, %v117
  %v130 = vpack.c.b16 %v120, %v119
  %v131 = vpack.c.b16 %v122, %v121
  %v132 = vpack.c.b16 %v124, %v123
  %141 = vmatpush.bf16.msra.mxu0 %v132
  %142 = vmatpush.bf16.msra.mxu0 %v131
  %143 = vmatpush.bf16.msra.mxu0 %v130
  %144 = vmatpush.bf16.msra.mxu0 %v129
  %145 = vmatpush.bf16.msra.mxu0 %v128
  %146 = vmatpush.bf16.msra.mxu0 %v127
  %147 = vmatpush.bf16.msra.mxu0 %v126
  %148 = vmatpush.bf16.msra.mxu0 %v125
  %149 = vmatmul.bf16.gmra.mxu0 %v77
  %v150 = vpop.f32.mrf.mxu0
  %v151 = vadd.f32 0.0, %v150
  %v152 = vpop.f32.mrf.mxu0
  %v153 = vadd.f32 0.0, %v152
  %154 = vmatmul.bf16.gmra.mxu0 %v78
  %v155 = vpop.f32.mrf.mxu0
  %v156 = vadd.f32 0.0, %v155
  %v157 = vpop.f32.mrf.mxu0
  %v158 = vadd.f32 0.0, %v157
  %159 = vmatmul.bf16.gmra.mxu0 %v79
  %v160 = vpop.f32.mrf.mxu0
  %v161 = vadd.f32 0.0, %v160
  %v162 = vpop.f32.mrf.mxu0
  %v163 = vadd.f32 0.0, %v162
  %164 = vmatmul.bf16.gmra.mxu0 %v80
  %v165 = vpop.f32.mrf.mxu0
  %v166 = vadd.f32 0.0, %v165
  %v167 = vpop.f32.mrf.mxu0
  %v168 = vadd.f32 0.0, %v167
  %169 = vmatmul.bf16.gmra.mxu0 %v81
  %v170 = vpop.f32.mrf.mxu0
  %v171 = vadd.f32 0.0, %v170
  %v172 = vpop.f32.mrf.mxu0
  %v173 = vadd.f32 0.0, %v172
  %174 = vmatmul.bf16.gmra.mxu0 %v82
  %v175 = vpop.f32.mrf.mxu0
  %v176 = vadd.f32 0.0, %v175
  %v177 = vpop.f32.mrf.mxu0
  %v178 = vadd.f32 0.0, %v177
  %179 = vmatmul.bf16.gmra.mxu0 %v83
  %v180 = vpop.f32.mrf.mxu0
  %v181 = vadd.f32 0.0, %v180
  %v182 = vpop.f32.mrf.mxu0
  %v183 = vadd.f32 0.0, %v182
  %184 = vmatmul.bf16.gmra.mxu0 %v84
  %v185 = vpop.f32.mrf.mxu0
  %v186 = vadd.f32 0.0, %v185
  %v187 = vpop.f32.mrf.mxu0
  %v188 = vadd.f32 0.0, %v187
  %189 = vdwg.mxu0
  %190 = vst [vmem:[%s2] sm:$0xff] %v151
  %191 = vst [vmem:[%s2 + $0x8] sm:$0xff] %v153
  %192 = vst [vmem:[%s2 + $0x10] sm:$0xff] %v156
  %193 = vst [vmem:[%s2 + $0x18] sm:$0xff] %v158
  %194 = vst [vmem:[%s2 + $0x20] sm:$0xff] %v161
  %195 = vst [vmem:[%s2 + $0x28] sm:$0xff] %v163
  %196 = vst [vmem:[%s2 + $0x30] sm:$0xff] %v166
  %197 = vst [vmem:[%s2 + $0x38] sm:$0xff] %v168
  %198 = vst [vmem:[%s2 + $0x40] sm:$0xff] %v171
  %199 = vst [vmem:[%s2 + $0x48] sm:$0xff] %v173
  %200 = vst [vmem:[%s2 + $0x50] sm:$0xff] %v176
  %201 = vst [vmem:[%s2 + $0x58] sm:$0xff] %v178
  %202 = vst [vmem:[%s2 + $0x60] sm:$0xff] %v181
  %203 = vst [vmem:[%s2 + $0x68] sm:$0xff] %v183
  %204 = vst [vmem:[%s2 + $0x70] sm:$0xff] %v186
  %205 = vst [vmem:[%s2 + $0x78] sm:$0xff] %v188
  %v206 = vadd.f32 %v151, %v153
  %v207 = vadd.f32 %v206, %v156
  %v208 = vadd.f32 %v207, %v158
  %v209 = vadd.f32 %v208, %v161
  %v210 = vadd.f32 %v209, %v163
  %v211 = vadd.f32 %v210, %v166
  %v212 = vadd.f32 %v211, %v168
  %v213 = vadd.f32 %v212, %v171
  %v214 = vadd.f32 %v213, %v173
  %v215 = vadd.f32 %v214, %v176
  %v216 = vadd.f32 %v215, %v178
  %v217 = vadd.f32 %v216, %v181
  %v218 = vadd.f32 %v217, %v183
  %v219 = vadd.f32 %v218, %v186
  %v220 = vadd.f32 %v219, %v188
  %v221 = vrot.slane %v220, 4
  %v222 = vadd.f32 %v220, %v221
  %v223 = vrot.slane %v222, 2
  %v224 = vadd.f32 %v222, %v223
  %v225 = vrot.slane %v224, 1
  %v226 = vadd.f32 %v224, %v225
  %v227 = vmul.f32 %v151, %v151
  %v228 = vmul.f32 %v153, %v153
  %v229 = vmul.f32 %v156, %v156
  %v230 = vmul.f32 %v158, %v158
  %v231 = vmul.f32 %v161, %v161
  %v232 = vmul.f32 %v163, %v163
  %v233 = vmul.f32 %v166, %v166
  %v234 = vmul.f32 %v168, %v168
  %v235 = vmul.f32 %v171, %v171
  %v236 = vmul.f32 %v173, %v173
  %v237 = vmul.f32 %v176, %v176
  %v238 = vmul.f32 %v178, %v178
  %v239 = vmul.f32 %v181, %v181
  %v240 = vmul.f32 %v183, %v183
  %v241 = vmul.f32 %v186, %v186
  %v242 = vmul.f32 %v188, %v188
  %v243 = vadd.f32 %v227, %v228
  %v244 = vadd.f32 %v243, %v229
  %v245 = vadd.f32 %v244, %v230
  %v246 = vadd.f32 %v245, %v231
  %v247 = vadd.f32 %v246, %v232
  %v248 = vadd.f32 %v247, %v233
  %v249 = vadd.f32 %v248, %v234
  %v250 = vadd.f32 %v249, %v235
  %v251 = vadd.f32 %v250, %v236
  %v252 = vadd.f32 %v251, %v237
  %v253 = vadd.f32 %v252, %v238
  %v254 = vadd.f32 %v253, %v239
  %v255 = vadd.f32 %v254, %v240
  %v256 = vadd.f32 %v255, %v241
  %v257 = vadd.f32 %v256, %v242
  %v258 = vrot.slane %v257, 4
  %v259 = vadd.f32 %v257, %v258
  %v260 = vrot.slane %v259, 2
  %v261 = vadd.f32 %v259, %v260
  %v262 = vrot.slane %v261, 1
  %v263 = vadd.f32 %v261, %v262
  %v264 = vlaneseq
  %v265 = vshrl.u32 %v264, 7
  %vm266 = vcmp.eq.s32.totalorder %v265, 0
  %vm267 = vcmp.eq.s32.totalorder %v265, 1
  %v268 = vsel %vm267, %v263, 0.0
  %v269 = vsel %vm266, %v226, %v268
  %270 = vst [vmem:[%s3] sm:$0xff] %v269
  // Predicated region
  $region10: #{residual_block.5} parent=0 // pred_check
    _
  $region11: #{residual_block.5} parent=0 // pred_check_branch
    %272 = sbr.rel (0) target = $region13
  $region12: #{residual_block.5} parent=0 // pred_region
    _
  $region13: #{residual_block.5} parent=0 // pred_fallthru
    _
  // Predicated region
  $region14: #{residual_block.5} parent=0 // pred_check
    _
  $region15: #{residual_block.5} parent=0 // pred_check_branch
    %274 = sbr.rel (0) target = $region17
  $region16: #{residual_block.5} parent=0 // pred_region
    _
  $region17: #{residual_block.5} parent=0 // pred_fallthru
    _
  // Predicated region
  $region18: #{residual_block.5} parent=0 // pred_check
    _
  $region19: #{residual_block.5} parent=0 // pred_check_branch
    %276 = sbr.rel (0) target = $region21
  $region20: #{residual_block.5} parent=0 // pred_region
    _
  $region21: #{residual_block.5} parent=0 // pred_fallthru
    _
  // Predicated region
  $region22: #{residual_block.5} parent=0 // pred_check
    _
  $region23: #{residual_block.5} parent=0 // pred_check_branch
    %278 = sbr.rel (0) target = $region25
  $region24: #{residual_block.5} parent=0 // pred_region
    _
  $region25: #{residual_block.5} parent=0 // pred_fallthru
    _

// kernel: residual_block.9
$region0: #{residual_block.9}
  #allocation0 [shape = 'u32[]', space=smem, size = 0x4, offset = 0x4, fixed_abs, tag = 'smem constant byte address 0x4 - core index']
  #allocation1 [shape = 'u32[72,128]{1,0:T(1,128)}', space=vmem, size = 0x9000, scoped, tag = 'internal scratch']
  %s0 = inlined_call_operand.vmem [shape: f32[128,128], index: 0, kind: input, shape index: {}]
  %s1 = inlined_call_operand.vmem [shape: f32[1,128], index: 1, kind: input, shape index: {}]
  %s2 = inlined_call_operand.vmem [shape: f32[1,128], index: 2, kind: input, shape index: {}]
  %s3 = inlined_call_operand.vmem [shape: f32[128,128], index: 3, kind: input, shape index: {}]
  %s4 = inlined_call_operand.vmem [shape: f32[1,128], index: 4, kind: input, shape index: {}]
  %s5 = inlined_call_operand.vmem [shape: f32[1,128], index: 5, kind: input, shape index: {}]
  %s6 = inlined_call_operand.vmem [shape: f32[128,128], index: 6, kind: output, shape index: {}]
  %s7 = sld [smem:[#allocation0]]
  $region34: #{residual_block.9} parent=0
    _
  %s9 = ssub.s32 1, %s7
  %s10 = scalar_select 0, %s9, %s7
  // Predicated region
  $region2: #{residual_block.9} parent=0 // pred_check
    _
  $region3: #{residual_block.9} parent=0 // pred_check_branch
    %12 = sbr.rel (0) target = $region5
  $region4: #{residual_block.9} parent=0 // pred_region
    _
  $region5: #{residual_block.9} parent=0 // pred_fallthru
    _
  // Predicated region
  $region6: #{residual_block.9} parent=0 // pred_check
    _
  $region7: #{residual_block.9} parent=0 // pred_check_branch
    %14 = sbr.rel (0) target = $region9
  $region8: #{residual_block.9} parent=0 // pred_region
    _
  $region9: #{residual_block.9} parent=0 // pred_fallthru
    _
  // Predicated region
  $region10: #{residual_block.9} parent=0 // pred_check
    _
  $region11: #{residual_block.9} parent=0 // pred_check_branch
    %16 = sbr.rel (0) target = $region13
  $region12: #{residual_block.9} parent=0 // pred_region
    _
  $region13: #{residual_block.9} parent=0 // pred_fallthru
    _
  // Predicated region
  $region14: #{residual_block.9} parent=0 // pred_check
    _
  $region15: #{residual_block.9} parent=0 // pred_check_branch
    %18 = sbr.rel (0) target = $region17
  $region16: #{residual_block.9} parent=0 // pred_region
    _
  $region17: #{residual_block.9} parent=0 // pred_fallthru
    _
  // Predicated region
  $region18: #{residual_block.9} parent=0 // pred_check
    _
  $region19: #{residual_block.9} parent=0 // pred_check_branch
    %20 = sbr.rel (0) target = $region21
  $region20: #{residual_block.9} parent=0 // pred_region
    _
  $region21: #{residual_block.9} parent=0 // pred_fallthru
    _
  // Predicated region
  $region22: #{residual_block.9} parent=0 // pred_check
    _
  $region23: #{residual_block.9} parent=0 // pred_check_branch
    %22 = sbr.rel (0) target = $region25
  $region24: #{residual_block.9} parent=0 // pred_region
    _
  $region25: #{residual_block.9} parent=0 // pred_fallthru
    _
  %v23 = vld [vmem:[%s0] sm:$0xff]
  %v24 = vld [vmem:[%s0 + $0x8] sm:$0xff]
  %v25 = vld [vmem:[%s0 + $0x10] sm:$0xff]
  %v26 = vld [vmem:[%s0 + $0x18] sm:$0xff]
  %v27 = vld [vmem:[%s0 + $0x20] sm:$0xff]
  %v28 = vld [vmem:[%s0 + $0x28] sm:$0xff]
  %v29 = vld [vmem:[%s0 + $0x30] sm:$0xff]
  %v30 = vld [vmem:[%s0 + $0x38] sm:$0xff]
  %v31 = vld [vmem:[%s0 + $0x40] sm:$0xff]
  %v32 = vld [vmem:[%s0 + $0x48] sm:$0xff]
  %v33 = vld [vmem:[%s0 + $0x50] sm:$0xff]
  %v34 = vld [vmem:[%s0 + $0x58] sm:$0xff]
  %v35 = vld [vmem:[%s0 + $0x60] sm:$0xff]
  %v36 = vld [vmem:[%s0 + $0x68] sm:$0xff]
  %v37 = vld [vmem:[%s0 + $0x70] sm:$0xff]
  %v38 = vld [vmem:[%s0 + $0x78] sm:$0xff]
  %v39 = vld [vmem:[%s1] sm:$0x1]
  %v41 = vperm.slane %v39, 0
  %v43 = vmul.f32 %v23, %v41
  %v44 = vmul.f32 %v24, %v41
  %v45 = vmul.f32 %v25, %v41
  %v46 = vmul.f32 %v26, %v41
  %v47 = vmul.f32 %v27, %v41
  %v48 = vmul.f32 %v28, %v41
  %v49 = vmul.f32 %v29, %v41
  %v50 = vmul.f32 %v30, %v41
  %v51 = vmul.f32 %v31, %v41
  %v52 = vmul.f32 %v32, %v41
  %v53 = vmul.f32 %v33, %v41
  %v54 = vmul.f32 %v34, %v41
  %v55 = vmul.f32 %v35, %v41
  %v56 = vmul.f32 %v36, %v41
  %v57 = vmul.f32 %v37, %v41
  %v58 = vmul.f32 %v38, %v41
  %v59 = vld [vmem:[%s2] sm:$0x1]
  %v61 = vperm.slane %v59, 0
  %v63 = vadd.f32 %v43, %v61
  %v64 = vadd.f32 %v44, %v61
  %v65 = vadd.f32 %v45, %v61
  %v66 = vadd.f32 %v46, %v61
  %v67 = vadd.f32 %v47, %v61
  %v68 = vadd.f32 %v48, %v61
  %v69 = vadd.f32 %v49, %v61
  %v70 = vadd.f32 %v50, %v61
  %v71 = vadd.f32 %v51, %v61
  %v72 = vadd.f32 %v52, %v61
  %v73 = vadd.f32 %v53, %v61
  %v74 = vadd.f32 %v54, %v61
  %v75 = vadd.f32 %v55, %v61
  %v76 = vadd.f32 %v56, %v61
  %v77 = vadd.f32 %v57, %v61
  %v78 = vadd.f32 %v58, %v61
  %v79 = vld [vmem:[%s3] sm:$0xff]
  %v80 = vld [vmem:[%s3 + $0x8] sm:$0xff]
  %v81 = vld [vmem:[%s3 + $0x10] sm:$0xff]
  %v82 = vld [vmem:[%s3 + $0x18] sm:$0xff]
  %v83 = vld [vmem:[%s3 + $0x20] sm:$0xff]
  %v84 = vld [vmem:[%s3 + $0x28] sm:$0xff]
  %v85 = vld [vmem:[%s3 + $0x30] sm:$0xff]
  %v86 = vld [vmem:[%s3 + $0x38] sm:$0xff]
  %v87 = vld [vmem:[%s3 + $0x40] sm:$0xff]
  %v88 = vld [vmem:[%s3 + $0x48] sm:$0xff]
  %v89 = vld [vmem:[%s3 + $0x50] sm:$0xff]
  %v90 = vld [vmem:[%s3 + $0x58] sm:$0xff]
  %v91 = vld [vmem:[%s3 + $0x60] sm:$0xff]
  %v92 = vld [vmem:[%s3 + $0x68] sm:$0xff]
  %v93 = vld [vmem:[%s3 + $0x70] sm:$0xff]
  %v94 = vld [vmem:[%s3 + $0x78] sm:$0xff]
  %v95 = vld [vmem:[%s4] sm:$0x1]
  %v97 = vperm.slane %v95, 0
  %v99 = vmul.f32 %v79, %v97
  %v100 = vmul.f32 %v80, %v97
  %v101 = vmul.f32 %v81, %v97
  %v102 = vmul.f32 %v82, %v97
  %v103 = vmul.f32 %v83, %v97
  %v104 = vmul.f32 %v84, %v97
  %v105 = vmul.f32 %v85, %v97
  %v106 = vmul.f32 %v86, %v97
  %v107 = vmul.f32 %v87, %v97
  %v108 = vmul.f32 %v88, %v97
  %v109 = vmul.f32 %v89, %v97
  %v110 = vmul.f32 %v90, %v97
  %v111 = vmul.f32 %v91, %v97
  %v112 = vmul.f32 %v92, %v97
  %v113 = vmul.f32 %v93, %v97
  %v114 = vmul.f32 %v94, %v97
  %v115 = vld [vmem:[%s5] sm:$0x1]
  %v117 = vperm.slane %v115, 0
  %v119 = vadd.f32 %v99, %v117
  %v120 = vadd.f32 %v100, %v117
  %v121 = vadd.f32 %v101, %v117
  %v122 = vadd.f32 %v102, %v117
  %v123 = vadd.f32 %v103, %v117
  %v124 = vadd.f32 %v104, %v117
  %v125 = vadd.f32 %v105, %v117
  %v126 = vadd.f32 %v106, %v117
  %v127 = vadd.f32 %v107, %v117
  %v128 = vadd.f32 %v108, %v117
  %v129 = vadd.f32 %v109, %v117
  %v130 = vadd.f32 %v110, %v117
  %v131 = vadd.f32 %v111, %v117
  %v132 = vadd.f32 %v112, %v117
  %v133 = vadd.f32 %v113, %v117
  %v134 = vadd.f32 %v114, %v117
  %v135 = vadd.f32 %v63, %v119
  %v136 = vadd.f32 %v64, %v120
  %v137 = vadd.f32 %v65, %v121
  %v138 = vadd.f32 %v66, %v122
  %v139 = vadd.f32 %v67, %v123
  %v140 = vadd.f32 %v68, %v124
  %v141 = vadd.f32 %v69, %v125
  %v142 = vadd.f32 %v70, %v126
  %v143 = vadd.f32 %v71, %v127
  %v144 = vadd.f32 %v72, %v128
  %v145 = vadd.f32 %v73, %v129
  %v146 = vadd.f32 %v74, %v130
  %v147 = vadd.f32 %v75, %v131
  %v148 = vadd.f32 %v76, %v132
  %v149 = vadd.f32 %v77, %v133
  %v150 = vadd.f32 %v78, %v134
  %v151 = vmax.f32 %v135, 0.0
  %v152 = vmax.f32 %v136, 0.0
  %v153 = vmax.f32 %v137, 0.0
  %v154 = vmax.f32 %v138, 0.0
  %v155 = vmax.f32 %v139, 0.0
  %v156 = vmax.f32 %v140, 0.0
  %v157 = vmax.f32 %v141, 0.0
  %v158 = vmax.f32 %v142, 0.0
  %v159 = vmax.f32 %v143, 0.0
  %v160 = vmax.f32 %v144, 0.0
  %v161 = vmax.f32 %v145, 0.0
  %v162 = vmax.f32 %v146, 0.0
  %v163 = vmax.f32 %v147, 0.0
  %v164 = vmax.f32 %v148, 0.0
  %v165 = vmax.f32 %v149, 0.0
  %v166 = vmax.f32 %v150, 0.0
  %167 = vst [vmem:[%s6] sm:$0xff] %v151
  %168 = vst [vmem:[%s6 + $0x8] sm:$0xff] %v152
  %169 = vst [vmem:[%s6 + $0x10] sm:$0xff] %v153
  %170 = vst [vmem:[%s6 + $0x18] sm:$0xff] %v154
  %171 = vst [vmem:[%s6 + $0x20] sm:$0xff] %v155
  %172 = vst [vmem:[%s6 + $0x28] sm:$0xff] %v156
  %173 = vst [vmem:[%s6 + $0x30] sm:$0xff] %v157
  %174 = vst [vmem:[%s6 + $0x38] sm:$0xff] %v158
  %175 = vst [vmem:[%s6 + $0x40] sm:$0xff] %v159
  %176 = vst [vmem:[%s6 + $0x48] sm:$0xff] %v160
  %177 = vst [vmem:[%s6 + $0x50] sm:$0xff] %v161
  %178 = vst [vmem:[%s6 + $0x58] sm:$0xff] %v162
  %179 = vst [vmem:[%s6 + $0x60] sm:$0xff] %v163
  %180 = vst [vmem:[%s6 + $0x68] sm:$0xff] %v164
  %181 = vst [vmem:[%s6 + $0x70] sm:$0xff] %v165
  %182 = vst [vmem:[%s6 + $0x78] sm:$0xff] %v166
  // Predicated region
  $region26: #{residual_block.9} parent=0 // pred_check
    _
  $region27: #{residual_block.9} parent=0 // pred_check_branch
    %184 = sbr.rel (0) target = $region29
  $region28: #{residual_block.9} parent=0 // pred_region
    _
  $region29: #{residual_block.9} parent=0 // pred_fallthru
    _
  // Predicated region
  $region30: #{residual_block.9} parent=0 // pred_check
    _
  $region31: #{residual_block.9} parent=0 // pred_check_branch
    %186 = sbr.rel (0) target = $region33
  $region32: #{residual_block.9} parent=0 // pred_region
    _
  $region33: #{residual_block.9} parent=0 // pred_fallthru
    _

// kernel: residual_block.7
$region0: #{residual_block.7}
  #allocation0 [shape = 'u32[]', space=smem, size = 0x4, offset = 0x4, fixed_abs, tag = 'smem constant byte address 0x4 - core index']
  #allocation1 [shape = 'u32[72,128]{1,0:T(1,128)}', space=vmem, size = 0x9000, scoped, tag = 'internal scratch']
  %s0 = inlined_call_operand.vmem [shape: bf16[128,1152], index: 0, kind: input, shape index: {}]
  %s1 = inlined_call_operand.vmem [shape: bf16[1152,128], index: 1, kind: input, shape index: {}]
  %s2 = inlined_call_operand.vmem [shape: f32[128,128], index: 2, kind: output, shape index: {0}]
  %s3 = inlined_call_operand.vmem [shape: f32[8,128], index: 3, kind: output, shape index: {1}]
  %4 = xla_tuple %s2, %s3
  %s5 = sld [smem:[#allocation0]]
  $region26: #{residual_block.7} parent=0
    _
  %s7 = ssub.s32 1, %s5
  %s8 = scalar_select 0, %s7, %s5
  // Predicated region
  $region2: #{residual_block.7} parent=0 // pred_check
    _
  $region3: #{residual_block.7} parent=0 // pred_check_branch
    %10 = sbr.rel (0) target = $region5
  $region4: #{residual_block.7} parent=0 // pred_region
    _
  $region5: #{residual_block.7} parent=0 // pred_fallthru
    _
  // Predicated region
  $region6: #{residual_block.7} parent=0 // pred_check
    _
  $region7: #{residual_block.7} parent=0 // pred_check_branch
    %12 = sbr.rel (0) target = $region9
  $region8: #{residual_block.7} parent=0 // pred_region
    _
  $region9: #{residual_block.7} parent=0 // pred_fallthru
    _
  %v13 = vld [vmem:[%s0] sm:$0xff]
  %v14 = vld [vmem:[%s0 + $0x8] sm:$0xff]
  %v15 = vld [vmem:[%s0 + $0x10] sm:$0xff]
  %v16 = vld [vmem:[%s0 + $0x18] sm:$0xff]
  %v17 = vld [vmem:[%s0 + $0x20] sm:$0xf]
  %v18 = vld [vmem:[%s0 + $0x24] sm:$0xff]
  %v19 = vld [vmem:[%s0 + $0x2c] sm:$0xff]
  %v20 = vld [vmem:[%s0 + $0x34] sm:$0xff]
  %v21 = vld [vmem:[%s0 + $0x3c] sm:$0xff]
  %v22 = vld [vmem:[%s0 + $0x44] sm:$0xf]
  %v23 = vld [vmem:[%s0 + $0x48] sm:$0xff]
  %v24 = vld [vmem:[%s0 + $0x50] sm:$0xff]
  %v25 = vld [vmem:[%s0 + $0x58] sm:$0xff]
  %v26 = vld [vmem:[%s0 + $0x60] sm:$0xff]
  %v27 = vld [vmem:[%s0 + $0x68] sm:$0xf]
  %v28 = vld [vmem:[%s0 + $0x6c] sm:$0xff]
  %v29 = vld [vmem:[%s0 + $0x74] sm:$0xff]
  %v30 = vld [vmem:[%s0 + $0x7c] sm:$0xff]
  %v31 = vld [vmem:[%s0 + $0x84] sm:$0xff]
  %v32 = vld [vmem:[%s0 + $0x8c] sm:$0xf]
  %v33 = vld [vmem:[%s0 + $0x90] sm:$0xff]
  %v34 = vld [vmem:[%s0 + $0x98] sm:$0xff]
  %v35 = vld [vmem:[%s0 + $0xa0] sm:$0xff]
  %v36 = vld [vmem:[%s0 + $0xa8] sm:$0xff]
  %v37 = vld [vmem:[%s0 + $0xb0] sm:$0xf]
  %v38 = vld [vmem:[%s0 + $0xb4] sm:$0xff]
  %v39 = vld [vmem:[%s0 + $0xbc] sm:$0xff]
  %v40 = vld [vmem:[%s0 + $0xc4] sm:$0xff]
  %v41 = vld [vmem:[%s0 + $0xcc] sm:$0xff]
  %v42 = vld [vmem:[%s0 + $0xd4] sm:$0xf]
  %v43 = vld [vmem:[%s0 + $0xd8] sm:$0xff]
  %v44 = vld [vmem:[%s0 + $0xe0] sm:$0xff]
  %v45 = vld [vmem:[%s0 + $0xe8] sm:$0xff]
  %v46 = vld [vmem:[%s0 + $0xf0] sm:$0xff]
  %v47 = vld [vmem:[%s0 + $0xf8] sm:$0xf]
  %v48 = vld [vmem:[%s0 + $0xfc] sm:$0xff]
  %v49 = vld [vmem:[%s0 + $0x104] sm:$0xff]
  %v50 = vld [vmem:[%s0 + $0x10c] sm:$0xff]
  %v51 = vld [vmem:[%s0 + $0x114] sm:$0xff]
  %v52 = vld [vmem:[%s0 + $0x11c] sm:$0xf]
  %v53 = vld [vmem:[%s0 + $0x120] sm:$0xff]
  %v54 = vld [vmem:[%s0 + $0x128] sm:$0xff]
  %v55 = vld [vmem:[%s0 + $0x130] sm:$0xff]
  %v56 = vld [vmem:[%s0 + $0x138] sm:$0xff]
  %v57 = vld [vmem:[%s0 + $0x140] sm:$0xf]
  %v58 = vld [vmem:[%s0 + $0x144] sm:$0xff]
  %v59 = vld [vmem:[%s0 + $0x14c] sm:$0xff]
  %v60 = vld [vmem:[%s0 + $0x154] sm:$0xff]
  %v61 = vld [vmem:[%s0 + $0x15c] sm:$0xff]
  %v62 = vld [vmem:[%s0 + $0x164] sm:$0xf]
  %v63 = vld [vmem:[%s0 + $0x168] sm:$0xff]
  %v64 = vld [vmem:[%s0 + $0x170] sm:$0xff]
  %v65 = vld [vmem:[%s0 + $0x178] sm:$0xff]
  %v66 = vld [vmem:[%s0 + $0x180] sm:$0xff]
  %v67 = vld [vmem:[%s0 + $0x188] sm:$0xf]
  %v68 = vld [vmem:[%s0 + $0x18c] sm:$0xff]
  %v69 = vld [vmem:[%s0 + $0x194] sm:$0xff]
  %v70 = vld [vmem:[%s0 + $0x19c] sm:$0xff]
  %v71 = vld [vmem:[%s0 + $0x1a4] sm:$0xff]
  %v72 = vld [vmem:[%s0 + $0x1ac] sm:$0xf]
  %v73 = vld [vmem:[%s0 + $0x1b0] sm:$0xff]
  %v74 = vld [vmem:[%s0 + $0x1b8] sm:$0xff]
  %v75 = vld [vmem:[%s0 + $0x1c0] sm:$0xff]
  %v76 = vld [vmem:[%s0 + $0x1c8] sm:$0xff]
  %v77 = vld [vmem:[%s0 + $0x1d0] sm:$0xf]
  %v78 = vld [vmem:[%s0 + $0x1d4] sm:$0xff]
  %v79 = vld [vmem:[%s0 + $0x1dc] sm:$0xff]
  %v80 = vld [vmem:[%s0 + $0x1e4] sm:$0xff]
  %v81 = vld [vmem:[%s0 + $0x1ec] sm:$0xff]
  %v82 = vld [vmem:[%s0 + $0x1f4] sm:$0xf]
  %v83 = vld [vmem:[%s0 + $0x1f8] sm:$0xff]
  %v84 = vld [vmem:[%s0 + $0x200] sm:$0xff]
  %v85 = vld [vmem:[%s0 + $0x208] sm:$0xff]
  %v86 = vld [vmem:[%s0 + $0x210] sm:$0xff]
  %v87 = vld [vmem:[%s0 + $0x218] sm:$0xf]
  %v88 = vld [vmem:[%s0 + $0x21c] sm:$0xff]
  %v89 = vld [vmem:[%s0 + $0x224] sm:$0xff]
  %v90 = vld [vmem:[%s0 + $0x22c] sm:$0xff]
  %v91 = vld [vmem:[%s0 + $0x234] sm:$0xff]
  %v92 = vld [vmem:[%s0 + $0x23c] sm:$0xf]
  %v93 = vld [vmem:[%s1] sm:$0xf]
  %v94 = vld [vmem:[%s1 + $0x4] sm:$0xf]
  %v95 = vld [vmem:[%s1 + $0x8] sm:$0xf]
  %v96 = vld [vmem:[%s1 + $0xc] sm:$0xf]
  %v97 = vld [vmem:[%s1 + $0x10] sm:$0xf]
  %v98 = vld [vmem:[%s1 + $0x14] sm:$0xf]
  %v99 = vld [vmem:[%s1 + $0x18] sm:$0xf]
  %v100 = vld [vmem:[%s1 + $0x1c] sm:$0xf]
  %v101 = vld [vmem:[%s1 + $0x20] sm:$0xf]
  %v102 = vld [vmem:[%s1 + $0x24] sm:$0xf]
  %v103 = vld [vmem:[%s1 + $0x28] sm:$0xf]
  %v104 = vld [vmem:[%s1 + $0x2c] sm:$0xf]
  %v105 = vld [vmem:[%s1 + $0x30] sm:$0xf]
  %v106 = vld [vmem:[%s1 + $0x34] sm:$0xf]
  %v107 = vld [vmem:[%s1 + $0x38] sm:$0xf]
  %v108 = vld [vmem:[%s1 + $0x3c] sm:$0xf]
  %v109 = vld [vmem:[%s1 + $0x40] sm:$0xf]
  %v110 = vld [vmem:[%s1 + $0x44] sm:$0xf]
  %v111 = vld [vmem:[%s1 + $0x48] sm:$0xf]
  %v112 = vld [vmem:[%s1 + $0x4c] sm:$0xf]
  %v113 = vld [vmem:[%s1 + $0x50] sm:$0xf]
  %v114 = vld [vmem:[%s1 + $0x54] sm:$0xf]
  %v115 = vld [vmem:[%s1 + $0x58] sm:$0xf]
  %v116 = vld [vmem:[%s1 + $0x5c] sm:$0xf]
  %v117 = vld [vmem:[%s1 + $0x60] sm:$0xf]
  %v118 = vld [vmem:[%s1 + $0x64] sm:$0xf]
  %v119 = vld [vmem:[%s1 + $0x68] sm:$0xf]
  %v120 = vld [vmem:[%s1 + $0x6c] sm:$0xf]
  %v121 = vld [vmem:[%s1 + $0x70] sm:$0xf]
  %v122 = vld [vmem:[%s1 + $0x74] sm:$0xf]
  %v123 = vld [vmem:[%s1 + $0x78] sm:$0xf]
  %v124 = vld [vmem:[%s1 + $0x7c] sm:$0xf]
  %v125 = vld [vmem:[%s1 + $0x80] sm:$0xf]
  %v126 = vld [vmem:[%s1 + $0x84] sm:$0xf]
  %v127 = vld [vmem:[%s1 + $0x88] sm:$0xf]
  %v128 = vld [vmem:[%s1 + $0x8c] sm:$0xf]
  %v129 = vld [vmem:[%s1 + $0x90] sm:$0xf]
  %v130 = vld [vmem:[%s1 + $0x94] sm:$0xf]
  %v131 = vld [vmem:[%s1 + $0x98] sm:$0xf]
  %v132 = vld [vmem:[%s1 + $0x9c] sm:$0xf]
  %v133 = vld [vmem:[%s1 + $0xa0] sm:$0xf]
  %v134 = vld [vmem:[%s1 + $0xa4] sm:$0xf]
  %v135 = vld [vmem:[%s1 + $0xa8] sm:$0xf]
  %v136 = vld [vmem:[%s1 + $0xac] sm:$0xf]
  %v137 = vld [vmem:[%s1 + $0xb0] sm:$0xf]
  %v138 = vld [vmem:[%s1 + $0xb4] sm:$0xf]
  %v139 = vld [vmem:[%s1 + $0xb8] sm:$0xf]
  %v140 = vld [vmem:[%s1 + $0xbc] sm:$0xf]
  %v141 = vld [vmem:[%s1 + $0xc0] sm:$0xf]
  %v142 = vld [vmem:[%s1 + $0xc4] sm:$0xf]
  %v143 = vld [vmem:[%s1 + $0xc8] sm:$0xf]
  %v144 = vld [vmem:[%s1 + $0xcc] sm:$0xf]
  %v145 = vld [vmem:[%s1 + $0xd0] sm:$0xf]
  %v146 = vld [vmem:[%s1 + $0xd4] sm:$0xf]
  %v147 = vld [vmem:[%s1 + $0xd8] sm:$0xf]
  %v148 = vld [vmem:[%s1 + $0xdc] sm:$0xf]
  %v149 = vld [vmem:[%s1 + $0xe0] sm:$0xf]
  %v150 = vld [vmem:[%s1 + $0xe4] sm:$0xf]
  %v151 = vld [vmem:[%s1 + $0xe8] sm:$0xf]
  %v152 = vld [vmem:[%s1 + $0xec] sm:$0xf]
  %v153 = vld [vmem:[%s1 + $0xf0] sm:$0xf]
  %v154 = vld [vmem:[%s1 + $0xf4] sm:$0xf]
  %v155 = vld [vmem:[%s1 + $0xf8] sm:$0xf]
  %v156 = vld [vmem:[%s1 + $0xfc] sm:$0xf]
  %v157 = vld [vmem:[%s1 + $0x100] sm:$0xf]
  %v158 = vld [vmem:[%s1 + $0x104] sm:$0xf]
  %v159 = vld [vmem:[%s1 + $0x108] sm:$0xf]
  %v160 = vld [vmem:[%s1 + $0x10c] sm:$0xf]
  %v161 = vld [vmem:[%s1 + $0x110] sm:$0xf]
  %v162 = vld [vmem:[%s1 + $0x114] sm:$0xf]
  %v163 = vld [vmem:[%s1 + $0x118] sm:$0xf]
  %v164 = vld [vmem:[%s1 + $0x11c] sm:$0xf]
  %v165 = vld [vmem:[%s1 + $0x120] sm:$0xf]
  %v166 = vld [vmem:[%s1 + $0x124] sm:$0xf]
  %v167 = vld [vmem:[%s1 + $0x128] sm:$0xf]
  %v168 = vld [vmem:[%s1 + $0x12c] sm:$0xf]
  %v169 = vld [vmem:[%s1 + $0x130] sm:$0xf]
  %v170 = vld [vmem:[%s1 + $0x134] sm:$0xf]
  %v171 = vld [vmem:[%s1 + $0x138] sm:$0xf]
  %v172 = vld [vmem:[%s1 + $0x13c] sm:$0xf]
  %v173 = vld [vmem:[%s1 + $0x140] sm:$0xf]
  %v174 = vld [vmem:[%s1 + $0x144] sm:$0xf]
  %v175 = vld [vmem:[%s1 + $0x148] sm:$0xf]
  %v176 = vld [vmem:[%s1 + $0x14c] sm:$0xf]
  %v177 = vld [vmem:[%s1 + $0x150] sm:$0xf]
  %v178 = vld [vmem:[%s1 + $0x154] sm:$0xf]
  %v179 = vld [vmem:[%s1 + $0x158] sm:$0xf]
  %v180 = vld [vmem:[%s1 + $0x15c] sm:$0xf]
  %v181 = vld [vmem:[%s1 + $0x160] sm:$0xf]
  %v182 = vld [vmem:[%s1 + $0x164] sm:$0xf]
  %v183 = vld [vmem:[%s1 + $0x168] sm:$0xf]
  %v184 = vld [vmem:[%s1 + $0x16c] sm:$0xf]
  %v185 = vld [vmem:[%s1 + $0x170] sm:$0xf]
  %v186 = vld [vmem:[%s1 + $0x174] sm:$0xf]
  %v187 = vld [vmem:[%s1 + $0x178] sm:$0xf]
  %v188 = vld [vmem:[%s1 + $0x17c] sm:$0xf]
  %v189 = vld [vmem:[%s1 + $0x180] sm:$0xf]
  %v190 = vld [vmem:[%s1 + $0x184] sm:$0xf]
  %v191 = vld [vmem:[%s1 + $0x188] sm:$0xf]
  %v192 = vld [vmem:[%s1 + $0x18c] sm:$0xf]
  %v193 = vld [vmem:[%s1 + $0x190] sm:$0xf]
  %v194 = vld [vmem:[%s1 + $0x194] sm:$0xf]
  %v195 = vld [vmem:[%s1 + $0x198] sm:$0xf]
  %v196 = vld [vmem:[%s1 + $0x19c] sm:$0xf]
  %v197 = vld [vmem:[%s1 + $0x1a0] sm:$0xf]
  %v198 = vld [vmem:[%s1 + $0x1a4] sm:$0xf]
  %v199 = vld [vmem:[%s1 + $0x1a8] sm:$0xf]
  %v200 = vld [vmem:[%s1 + $0x1ac] sm:$0xf]
  %v201 = vld [vmem:[%s1 + $0x1b0] sm:$0xf]
  %v202 = vld [vmem:[%s1 + $0x1b4] sm:$0xf]
  %v203 = vld [vmem:[%s1 + $0x1b8] sm:$0xf]
  %v204 = vld [vmem:[%s1 + $0x1bc] sm:$0xf]
  %v205 = vld [vmem:[%s1 + $0x1c0] sm:$0xf]
  %v206 = vld [vmem:[%s1 + $0x1c4] sm:$0xf]
  %v207 = vld [vmem:[%s1 + $0x1c8] sm:$0xf]
  %v208 = vld [vmem:[%s1 + $0x1cc] sm:$0xf]
  %v209 = vld [vmem:[%s1 + $0x1d0] sm:$0xf]
  %v210 = vld [vmem:[%s1 + $0x1d4] sm:$0xf]
  %v211 = vld [vmem:[%s1 + $0x1d8] sm:$0xf]
  %v212 = vld [vmem:[%s1 + $0x1dc] sm:$0xf]
  %v213 = vld [vmem:[%s1 + $0x1e0] sm:$0xf]
  %v214 = vld [vmem:[%s1 + $0x1e4] sm:$0xf]
  %v215 = vld [vmem:[%s1 + $0x1e8] sm:$0xf]
  %v216 = vld [vmem:[%s1 + $0x1ec] sm:$0xf]
  %v217 = vld [vmem:[%s1 + $0x1f0] sm:$0xf]
  %v218 = vld [vmem:[%s1 + $0x1f4] sm:$0xf]
  %v219 = vld [vmem:[%s1 + $0x1f8] sm:$0xf]
  %v220 = vld [vmem:[%s1 + $0x1fc] sm:$0xf]
  %v221 = vld [vmem:[%s1 + $0x200] sm:$0xf]
  %v222 = vld [vmem:[%s1 + $0x204] sm:$0xf]
  %v223 = vld [vmem:[%s1 + $0x208] sm:$0xf]
  %v224 = vld [vmem:[%s1 + $0x20c] sm:$0xf]
  %v225 = vld [vmem:[%s1 + $0x210] sm:$0xf]
  %v226 = vld [vmem:[%s1 + $0x214] sm:$0xf]
  %v227 = vld [vmem:[%s1 + $0x218] sm:$0xf]
  %v228 = vld [vmem:[%s1 + $0x21c] sm:$0xf]
  %v229 = vld [vmem:[%s1 + $0x220] sm:$0xf]
  %v230 = vld [vmem:[%s1 + $0x224] sm:$0xf]
  %v231 = vld [vmem:[%s1 + $0x228] sm:$0xf]
  %v232 = vld [vmem:[%s1 + $0x22c] sm:$0xf]
  %v233 = vld [vmem:[%s1 + $0x230] sm:$0xf]
  %v234 = vld [vmem:[%s1 + $0x234] sm:$0xf]
  %v235 = vld [vmem:[%s1 + $0x238] sm:$0xf]
  %v236 = vld [vmem:[%s1 + $0x23c] sm:$0xf]
  %v317 = vunpack.c.l.b16 %v13
  %v318 = vunpack.c.h.b16 %v13
  %v319 = vunpack.c.l.b16 %v14
  %v320 = vunpack.c.h.b16 %v14
  %v321 = vunpack.c.l.b16 %v15
  %v322 = vunpack.c.h.b16 %v15
  %v323 = vunpack.c.l.b16 %v16
  %v324 = vunpack.c.h.b16 %v16
  %v325 = vunpack.c.l.b16 %v17
  %v326 = vunpack.c.l.b16 %v18
  %v327 = vunpack.c.h.b16 %v18
  %v328 = vunpack.c.l.b16 %v19
  %v329 = vunpack.c.h.b16 %v19
  %v330 = vunpack.c.l.b16 %v20
  %v331 = vunpack.c.h.b16 %v20
  %v332 = vunpack.c.l.b16 %v21
  %v333 = vunpack.c.h.b16 %v21
  %v334 = vunpack.c.l.b16 %v22
  %v335 = vunpack.c.l.b16 %v23
  %v336 = vunpack.c.h.b16 %v23
  %v337 = vunpack.c.l.b16 %v24
  %v338 = vunpack.c.h.b16 %v24
  %v339 = vunpack.c.l.b16 %v25
  %v340 = vunpack.c.h.b16 %v25
  %v341 = vunpack.c.l.b16 %v26
  %v342 = vunpack.c.h.b16 %v26
  %v343 = vunpack.c.l.b16 %v27
  %v344 = vunpack.c.l.b16 %v28
  %v345 = vunpack.c.h.b16 %v28
  %v346 = vunpack.c.l.b16 %v29
  %v347 = vunpack.c.h.b16 %v29
  %v348 = vunpack.c.l.b16 %v30
  %v349 = vunpack.c.h.b16 %v30
  %v350 = vunpack.c.l.b16 %v31
  %v351 = vunpack.c.h.b16 %v31
  %v352 = vunpack.c.l.b16 %v32
  %v353 = vunpack.c.l.b16 %v33
  %v354 = vunpack.c.h.b16 %v33
  %v355 = vunpack.c.l.b16 %v34
  %v356 = vunpack.c.h.b16 %v34
  %v357 = vunpack.c.l.b16 %v35
  %v358 = vunpack.c.h.b16 %v35
  %v359 = vunpack.c.l.b16 %v36
  %v360 = vunpack.c.h.b16 %v36
  %v361 = vunpack.c.l.b16 %v37
  %v362 = vunpack.c.l.b16 %v38
  %v363 = vunpack.c.h.b16 %v38
  %v364 = vunpack.c.l.b16 %v39
  %v365 = vunpack.c.h.b16 %v39
  %v366 = vunpack.c.l.b16 %v40
  %v367 = vunpack.c.h.b16 %v40
  %v368 = vunpack.c.l.b16 %v41
  %v369 = vunpack.c.h.b16 %v41
  %v370 = vunpack.c.l.b16 %v42
  %v371 = vunpack.c.l.b16 %v43
  %v372 = vunpack.c.h.b16 %v43
  %v373 = vunpack.c.l.b16 %v44
  %v374 = vunpack.c.h.b16 %v44
  %v375 = vunpack.c.l.b16 %v45
  %v376 = vunpack.c.h.b16 %v45
  %v377 = vunpack.c.l.b16 %v46
  %v378 = vunpack.c.h.b16 %v46
  %v379 = vunpack.c.l.b16 %v47
  %v380 = vunpack.c.l.b16 %v48
  %v381 = vunpack.c.h.b16 %v48
  %v382 = vunpack.c.l.b16 %v49
  %v383 = vunpack.c.h.b16 %v49
  %v384 = vunpack.c.l.b16 %v50
  %v385 = vunpack.c.h.b16 %v50
  %v386 = vunpack.c.l.b16 %v51
  %v387 = vunpack.c.h.b16 %v51
  %v388 = vunpack.c.l.b16 %v52
  %v389 = vunpack.c.l.b16 %v53
  %v390 = vunpack.c.h.b16 %v53
  %v391 = vunpack.c.l.b16 %v54
  %v392 = vunpack.c.h.b16 %v54
  %v393 = vunpack.c.l.b16 %v55
  %v394 = vunpack.c.h.b16 %v55
  %v395 = vunpack.c.l.b16 %v56
  %v396 = vunpack.c.h.b16 %v56
  %v397 = vunpack.c.l.b16 %v57
  %v398 = vunpack.c.l.b16 %v58
  %v399 = vunpack.c.h.b16 %v58
  %v400 = vunpack.c.l.b16 %v59
  %v401 = vunpack.c.h.b16 %v59
  %v402 = vunpack.c.l.b16 %v60
  %v403 = vunpack.c.h.b16 %v60
  %v404 = vunpack.c.l.b16 %v61
  %v405 = vunpack.c.h.b16 %v61
  %v406 = vunpack.c.l.b16 %v62
  %v407 = vunpack.c.l.b16 %v63
  %v408 = vunpack.c.h.b16 %v63
  %v409 = vunpack.c.l.b16 %v64
  %v410 = vunpack.c.h.b16 %v64
  %v411 = vunpack.c.l.b16 %v65
  %v412 = vunpack.c.h.b16 %v65
  %v413 = vunpack.c.l.b16 %v66
  %v414 = vunpack.c.h.b16 %v66
  %v415 = vunpack.c.l.b16 %v67
  %v416 = vunpack.c.l.b16 %v68
  %v417 = vunpack.c.h.b16 %v68
  %v418 = vunpack.c.l.b16 %v69
  %v419 = vunpack.c.h.b16 %v69
  %v420 = vunpack.c.l.b16 %v70
  %v421 = vunpack.c.h.b16 %v70
  %v422 = vunpack.c.l.b16 %v71
  %v423 = vunpack.c.h.b16 %v71
  %v424 = vunpack.c.l.b16 %v72
  %v425 = vunpack.c.l.b16 %v73
  %v426 = vunpack.c.h.b16 %v73
  %v427 = vunpack.c.l.b16 %v74
  %v428 = vunpack.c.h.b16 %v74
  %v429 = vunpack.c.l.b16 %v75
  %v430 = vunpack.c.h.b16 %v75
  %v431 = vunpack.c.l.b16 %v76
  %v432 = vunpack.c.h.b16 %v76
  %v433 = vunpack.c.l.b16 %v77
  %v434 = vunpack.c.l.b16 %v78
  %v435 = vunpack.c.h.b16 %v78
  %v436 = vunpack.c.l.b16 %v79
  %v437 = vunpack.c.h.b16 %v79
  %v438 = vunpack.c.l.b16 %v80
  %v439 = vunpack.c.h.b16 %v80
  %v440 = vunpack.c.l.b16 %v81
  %v441 = vunpack.c.h.b16 %v81
  %v442 = vunpack.c.l.b16 %v82
  %v443 = vunpack.c.l.b16 %v83
  %v444 = vunpack.c.h.b16 %v83
  %v445 = vunpack.c.l.b16 %v84
  %v446 = vunpack.c.h.b16 %v84
  %v447 = vunpack.c.l.b16 %v85
  %v448 = vunpack.c.h.b16 %v85
  %v449 = vunpack.c.l.b16 %v86
  %v450 = vunpack.c.h.b16 %v86
  %v451 = vunpack.c.l.b16 %v87
  %v452 = vunpack.c.l.b16 %v88
  %v453 = vunpack.c.h.b16 %v88
  %v454 = vunpack.c.l.b16 %v89
  %v455 = vunpack.c.h.b16 %v89
  %v456 = vunpack.c.l.b16 %v90
  %v457 = vunpack.c.h.b16 %v90
  %v458 = vunpack.c.l.b16 %v91
  %v459 = vunpack.c.h.b16 %v91
  %v460 = vunpack.c.l.b16 %v92
  %v461 = vpack.c.b16 %v326, %v317
  %v462 = vpack.c.b16 %v327, %v318
  %v463 = vpack.c.b16 %v328, %v319
  %v464 = vpack.c.b16 %v329, %v320
  %v465 = vpack.c.b16 %v330, %v321
  %v466 = vpack.c.b16 %v331, %v322
  %v467 = vpack.c.b16 %v332, %v323
  %v468 = vpack.c.b16 %v333, %v324
  %v469 = vpack.c.b16 %v334, %v325
  %v470 = vpack.c.b16 %v344, %v335
  %v471 = vpack.c.b16 %v345, %v336
  %v472 = vpack.c.b16 %v346, %v337
  %v473 = vpack.c.b16 %v347, %v338
  %v474 = vpack.c.b16 %v348, %v339
  %v475 = vpack.c.b16 %v349, %v340
  %v476 = vpack.c.b16 %v350, %v341
  %v477 = vpack.c.b16 %v351, %v342
  %v478 = vpack.c.b16 %v352, %v343
  %v479 = vpack.c.b16 %v362, %v353
  %v480 = vpack.c.b16 %v363, %v354
  %v481 = vpack.c.b16 %v364, %v355
  %v482 = vpack.c.b16 %v365, %v356
  %v483 = vpack.c.b16 %v366, %v357
  %v484 = vpack.c.b16 %v367, %v358
  %v485 = vpack.c.b16 %v368, %v359
  %v486 = vpack.c.b16 %v369, %v360
  %v487 = vpack.c.b16 %v370, %v361
  %v488 = vpack.c.b16 %v380, %v371
  %v489 = vpack.c.b16 %v381, %v372
  %v490 = vpack.c.b16 %v382, %v373
  %v491 = vpack.c.b16 %v383, %v374
  %v492 = vpack.c.b16 %v384, %v375
  %v493 = vpack.c.b16 %v385, %v376
  %v494 = vpack.c.b16 %v386, %v377
  %v495 = vpack.c.b16 %v387, %v378
  %v496 = vpack.c.b16 %v388, %v379
  %v497 = vpack.c.b16 %v398, %v389
  %v498 = vpack.c.b16 %v399, %v390
  %v499 = vpack.c.b16 %v400, %v391
  %v500 = vpack.c.b16 %v401, %v392
  %v501 = vpack.c.b16 %v402, %v393
  %v502 = vpack.c.b16 %v403, %v394
  %v503 = vpack.c.b16 %v404, %v395
  %v504 = vpack.c.b16 %v405, %v396
  %v505 = vpack.c.b16 %v406, %v397
  %v506 = vpack.c.b16 %v416, %v407
  %v507 = vpack.c.b16 %v417, %v408
  %v508 = vpack.c.b16 %v418, %v409
  %v509 = vpack.c.b16 %v419, %v410
  %v510 = vpack.c.b16 %v420, %v411
  %v511 = vpack.c.b16 %v421, %v412
  %v512 = vpack.c.b16 %v422, %v413
  %v513 = vpack.c.b16 %v423, %v414
  %v514 = vpack.c.b16 %v424, %v415
  %v515 = vpack.c.b16 %v434, %v425
  %v516 = vpack.c.b16 %v435, %v426
  %v517 = vpack.c.b16 %v436, %v427
  %v518 = vpack.c.b16 %v437, %v428
  %v519 = vpack.c.b16 %v438, %v429
  %v520 = vpack.c.b16 %v439, %v430
  %v521 = vpack.c.b16 %v440, %v431
  %v522 = vpack.c.b16 %v441, %v432
  %v523 = vpack.c.b16 %v442, %v433
  %v524 = vpack.c.b16 %v452, %v443
  %v525 = vpack.c.b16 %v453, %v444
  %v526 = vpack.c.b16 %v454, %v445
  %v527 = vpack.c.b16 %v455, %v446
  %v528 = vpack.c.b16 %v456, %v447
  %v529 = vpack.c.b16 %v457, %v448
  %v530 = vpack.c.b16 %v458, %v449
  %v531 = vpack.c.b16 %v459, %v450
  %v532 = vpack.c.b16 %v460, %v451
  %v749 = vunpack.c.l.b16 %v93
  %v750 = vunpack.c.l.b16 %v94
  %v751 = vunpack.c.l.b16 %v95
  %v752 = vunpack.c.l.b16 %v96
  %v753 = vunpack.c.l.b16 %v97
  %v754 = vunpack.c.l.b16 %v98
  %v755 = vunpack.c.l.b16 %v99
  %v756 = vunpack.c.l.b16 %v100
  %v757 = vunpack.c.l.b16 %v101
  %v758 = vunpack.c.l.b16 %v102
  %v759 = vunpack.c.l.b16 %v103
  %v760 = vunpack.c.l.b16 %v104
  %v761 = vunpack.c.l.b16 %v105
  %v762 = vunpack.c.l.b16 %v106
  %v763 = vunpack.c.l.b16 %v107
  %v764 = vunpack.c.l.b16 %v108
  %v765 = vunpack.c.l.b16 %v109
  %v766 = vunpack.c.l.b16 %v110
  %v767 = vunpack.c.l.b16 %v111
  %v768 = vunpack.c.l.b16 %v112
  %v769 = vunpack.c.l.b16 %v113
  %v770 = vunpack.c.l.b16 %v114
  %v771 = vunpack.c.l.b16 %v115
  %v772 = vunpack.c.l.b16 %v116
  %v773 = vunpack.c.l.b16 %v117
  %v774 = vunpack.c.l.b16 %v118
  %v775 = vunpack.c.l.b16 %v119
  %v776 = vunpack.c.l.b16 %v120
  %v777 = vunpack.c.l.b16 %v121
  %v778 = vunpack.c.l.b16 %v122
  %v779 = vunpack.c.l.b16 %v123
  %v780 = vunpack.c.l.b16 %v124
  %v781 = vunpack.c.l.b16 %v125
  %v782 = vunpack.c.l.b16 %v126
  %v783 = vunpack.c.l.b16 %v127
  %v784 = vunpack.c.l.b16 %v128
  %v785 = vunpack.c.l.b16 %v129
  %v786 = vunpack.c.l.b16 %v130
  %v787 = vunpack.c.l.b16 %v131
  %v788 = vunpack.c.l.b16 %v132
  %v789 = vunpack.c.l.b16 %v133
  %v790 = vunpack.c.l.b16 %v134
  %v791 = vunpack.c.l.b16 %v135
  %v792 = vunpack.c.l.b16 %v136
  %v793 = vunpack.c.l.b16 %v137
  %v794 = vunpack.c.l.b16 %v138
  %v795 = vunpack.c.l.b16 %v139
  %v796 = vunpack.c.l.b16 %v140
  %v797 = vunpack.c.l.b16 %v141
  %v798 = vunpack.c.l.b16 %v142
  %v799 = vunpack.c.l.b16 %v143
  %v800 = vunpack.c.l.b16 %v144
  %v801 = vunpack.c.l.b16 %v145
  %v802 = vunpack.c.l.b16 %v146
  %v803 = vunpack.c.l.b16 %v147
  %v804 = vunpack.c.l.b16 %v148
  %v805 = vunpack.c.l.b16 %v149
  %v806 = vunpack.c.l.b16 %v150
  %v807 = vunpack.c.l.b16 %v151
  %v808 = vunpack.c.l.b16 %v152
  %v809 = vunpack.c.l.b16 %v153
  %v810 = vunpack.c.l.b16 %v154
  %v811 = vunpack.c.l.b16 %v155
  %v812 = vunpack.c.l.b16 %v156
  %v813 = vunpack.c.l.b16 %v157
  %v814 = vunpack.c.l.b16 %v158
  %v815 = vunpack.c.l.b16 %v159
  %v816 = vunpack.c.l.b16 %v160
  %v817 = vunpack.c.l.b16 %v161
  %v818 = vunpack.c.l.b16 %v162
  %v819 = vunpack.c.l.b16 %v163
  %v820 = vunpack.c.l.b16 %v164
  %v821 = vunpack.c.l.b16 %v165
  %v822 = vunpack.c.l.b16 %v166
  %v823 = vunpack.c.l.b16 %v167
  %v824 = vunpack.c.l.b16 %v168
  %v825 = vunpack.c.l.b16 %v169
  %v826 = vunpack.c.l.b16 %v170
  %v827 = vunpack.c.l.b16 %v171
  %v828 = vunpack.c.l.b16 %v172
  %v829 = vunpack.c.l.b16 %v173
  %v830 = vunpack.c.l.b16 %v174
  %v831 = vunpack.c.l.b16 %v175
  %v832 = vunpack.c.l.b16 %v176
  %v833 = vunpack.c.l.b16 %v177
  %v834 = vunpack.c.l.b16 %v178
  %v835 = vunpack.c.l.b16 %v179
  %v836 = vunpack.c.l.b16 %v180
  %v837 = vunpack.c.l.b16 %v181
  %v838 = vunpack.c.l.b16 %v182
  %v839 = vunpack.c.l.b16 %v183
  %v840 = vunpack.c.l.b16 %v184
  %v841 = vunpack.c.l.b16 %v185
  %v842 = vunpack.c.l.b16 %v186
  %v843 = vunpack.c.l.b16 %v187
  %v844 = vunpack.c.l.b16 %v188
  %v845 = vunpack.c.l.b16 %v189
  %v846 = vunpack.c.l.b16 %v190
  %v847 = vunpack.c.l.b16 %v191
  %v848 = vunpack.c.l.b16 %v192
  %v849 = vunpack.c.l.b16 %v193
  %v850 = vunpack.c.l.b16 %v194
  %v851 = vunpack.c.l.b16 %v195
  %v852 = vunpack.c.l.b16 %v196
  %v853 = vunpack.c.l.b16 %v197
  %v854 = vunpack.c.l.b16 %v198
  %v855 = vunpack.c.l.b16 %v199
  %v856 = vunpack.c.l.b16 %v200
  %v857 = vunpack.c.l.b16 %v201
  %v858 = vunpack.c.l.b16 %v202
  %v859 = vunpack.c.l.b16 %v203
  %v860 = vunpack.c.l.b16 %v204
  %v861 = vunpack.c.l.b16 %v205
  %v862 = vunpack.c.l.b16 %v206
  %v863 = vunpack.c.l.b16 %v207
  %v864 = vunpack.c.l.b16 %v208
  %v865 = vunpack.c.l.b16 %v209
  %v866 = vunpack.c.l.b16 %v210
  %v867 = vunpack.c.l.b16 %v211
  %v868 = vunpack.c.l.b16 %v212
  %v869 = vunpack.c.l.b16 %v213
  %v870 = vunpack.c.l.b16 %v214
  %v871 = vunpack.c.l.b16 %v215
  %v872 = vunpack.c.l.b16 %v216
  %v873 = vunpack.c.l.b16 %v217
  %v874 = vunpack.c.l.b16 %v218
  %v875 = vunpack.c.l.b16 %v219
  %v876 = vunpack.c.l.b16 %v220
  %v877 = vunpack.c.l.b16 %v221
  %v878 = vunpack.c.l.b16 %v222
  %v879 = vunpack.c.l.b16 %v223
  %v880 = vunpack.c.l.b16 %v224
  %v881 = vunpack.c.l.b16 %v225
  %v882 = vunpack.c.l.b16 %v226
  %v883 = vunpack.c.l.b16 %v227
  %v884 = vunpack.c.l.b16 %v228
  %v885 = vunpack.c.l.b16 %v229
  %v886 = vunpack.c.l.b16 %v230
  %v887 = vunpack.c.l.b16 %v231
  %v888 = vunpack.c.l.b16 %v232
  %v889 = vunpack.c.l.b16 %v233
  %v890 = vunpack.c.l.b16 %v234
  %v891 = vunpack.c.l.b16 %v235
  %v892 = vunpack.c.l.b16 %v236
  %v893 = vpack.c.b16 %v750, %v749
  %v894 = vpack.c.b16 %v752, %v751
  %v895 = vpack.c.b16 %v754, %v753
  %v896 = vpack.c.b16 %v756, %v755
  %v897 = vpack.c.b16 %v758, %v757
  %v898 = vpack.c.b16 %v760, %v759
  %v899 = vpack.c.b16 %v762, %v761
  %v900 = vpack.c.b16 %v764, %v763
  %v901 = vpack.c.b16 %v766, %v765
  %v902 = vpack.c.b16 %v768, %v767
  %v903 = vpack.c.b16 %v770, %v769
  %v904 = vpack.c.b16 %v772, %v771
  %v905 = vpack.c.b16 %v774, %v773
  %v906 = vpack.c.b16 %v776, %v775
  %v907 = vpack.c.b16 %v778, %v777
  %v908 = vpack.c.b16 %v780, %v779
  %v909 = vpack.c.b16 %v782, %v781
  %v910 = vpack.c.b16 %v784, %v783
  %v911 = vpack.c.b16 %v786, %v785
  %v912 = vpack.c.b16 %v788, %v787
  %v913 = vpack.c.b16 %v790, %v789
  %v914 = vpack.c.b16 %v792, %v791
  %v915 = vpack.c.b16 %v794, %v793
  %v916 = vpack.c.b16 %v796, %v795
  %v917 = vpack.c.b16 %v798, %v797
  %v918 = vpack.c.b16 %v800, %v799
  %v919 = vpack.c.b16 %v802, %v801
  %v920 = vpack.c.b16 %v804, %v803
  %v921 = vpack.c.b16 %v806, %v805
  %v922 = vpack.c.b16 %v808, %v807
  %v923 = vpack.c.b16 %v810, %v809
  %v924 = vpack.c.b16 %v812, %v811
  %v925 = vpack.c.b16 %v814, %v813
  %v926 = vpack.c.b16 %v816, %v815
  %v927 = vpack.c.b16 %v818, %v817
  %v928 = vpack.c.b16 %v820, %v819
  %v929 = vpack.c.b16 %v822, %v821
  %v930 = vpack.c.b16 %v824, %v823
  %v931 = vpack.c.b16 %v826, %v825
  %v932 = vpack.c.b16 %v828, %v827
  %v933 = vpack.c.b16 %v830, %v829
  %v934 = vpack.c.b16 %v832, %v831
  %v935 = vpack.c.b16 %v834, %v833
  %v936 = vpack.c.b16 %v836, %v835
  %v937 = vpack.c.b16 %v838, %v837
  %v938 = vpack.c.b16 %v840, %v839
  %v939 = vpack.c.b16 %v842, %v841
  %v940 = vpack.c.b16 %v844, %v843
  %v941 = vpack.c.b16 %v846, %v845
  %v942 = vpack.c.b16 %v848, %v847
  %v943 = vpack.c.b16 %v850, %v849
  %v944 = vpack.c.b16 %v852, %v851
  %v945 = vpack.c.b16 %v854, %v853
  %v946 = vpack.c.b16 %v856, %v855
  %v947 = vpack.c.b16 %v858, %v857
  %v948 = vpack.c.b16 %v860, %v859
  %v949 = vpack.c.b16 %v862, %v861
  %v950 = vpack.c.b16 %v864, %v863
  %v951 = vpack.c.b16 %v866, %v865
  %v952 = vpack.c.b16 %v868, %v867
  %v953 = vpack.c.b16 %v870, %v869
  %v954 = vpack.c.b16 %v872, %v871
  %v955 = vpack.c.b16 %v874, %v873
  %v956 = vpack.c.b16 %v876, %v875
  %v957 = vpack.c.b16 %v878, %v877
  %v958 = vpack.c.b16 %v880, %v879
  %v959 = vpack.c.b16 %v882, %v881
  %v960 = vpack.c.b16 %v884, %v883
  %v961 = vpack.c.b16 %v886, %v885
  %v962 = vpack.c.b16 %v888, %v887
  %v963 = vpack.c.b16 %v890, %v889
  %v964 = vpack.c.b16 %v892, %v891
  %1037 = vmatpush.bf16.msra.mxu0 %v900
  %1038 = vmatpush.bf16.msra.mxu0 %v899
  %1039 = vmatpush.bf16.msra.mxu0 %v898
  %1040 = vmatpush.bf16.msra.mxu0 %v897
  %1041 = vmatpush.bf16.msra.mxu0 %v896
  %1042 = vmatpush.bf16.msra.mxu0 %v895
  %1043 = vmatpush.bf16.msra.mxu0 %v894
  %1044 = vmatpush.bf16.msra.mxu0 %v893
  %1045 = vmatmul.bf16.gmra.mxu0 %v461
  %v1046 = vpop.f32.mrf.mxu0
  %v1047 = vadd.f32 0.0, %v1046
  %v1048 = vpop.f32.mrf.mxu0
  %v1049 = vadd.f32 0.0, %v1048
  %1050 = vmatmul.bf16.gmra.mxu0 %v470
  %v1051 = vpop.f32.mrf.mxu0
  %v1052 = vadd.f32 0.0, %v1051
  %v1053 = vpop.f32.mrf.mxu0
  %v1054 = vadd.f32 0.0, %v1053
  %1055 = vmatmul.bf16.gmra.mxu0 %v479
  %v1056 = vpop.f32.mrf.mxu0
  %v1057 = vadd.f32 0.0, %v1056
  %v1058 = vpop.f32.mrf.mxu0
  %v1059 = vadd.f32 0.0, %v1058
  %1060 = vmatmul.bf16.gmra.mxu0 %v488
  %v1061 = vpop.f32.mrf.mxu0
  %v1062 = vadd.f32 0.0, %v1061
  %v1063 = vpop.f32.mrf.mxu0
  %v1064 = vadd.f32 0.0, %v1063
  %1065 = vmatmul.bf16.gmra.mxu0 %v497
  %v1066 = vpop.f32.mrf.mxu0
  %v1067 = vadd.f32 0.0, %v1066
  %v1068 = vpop.f32.mrf.mxu0
  %v1069 = vadd.f32 0.0, %v1068
  %1070 = vmatmul.bf16.gmra.mxu0 %v506
  %v1071 = vpop.f32.mrf.mxu0
  %v1072 = vadd.f32 0.0, %v1071
  %v1073 = vpop.f32.mrf.mxu0
  %v1074 = vadd.f32 0.0, %v1073
  %1075 = vmatmul.bf16.gmra.mxu0 %v515
  %v1076 = vpop.f32.mrf.mxu0
  %v1077 = vadd.f32 0.0, %v1076
  %v1078 = vpop.f32.mrf.mxu0
  %v1079 = vadd.f32 0.0, %v1078
  %1080 = vmatmul.bf16.gmra.mxu0 %v524
  %v1081 = vpop.f32.mrf.mxu0
  %v1082 = vadd.f32 0.0, %v1081
  %v1083 = vpop.f32.mrf.mxu0
  %v1084 = vadd.f32 0.0, %v1083
  %1085 = vdwg.mxu0
  %1086 = vmatpush.bf16.msra.mxu0 %v908
  %1087 = vmatpush.bf16.msra.mxu0 %v907
  %1088 = vmatpush.bf16.msra.mxu0 %v906
  %1089 = vmatpush.bf16.msra.mxu0 %v905
  %1090 = vmatpush.bf16.msra.mxu0 %v904
  %1091 = vmatpush.bf16.msra.mxu0 %v903
  %1092 = vmatpush.bf16.msra.mxu0 %v902
  %1093 = vmatpush.bf16.msra.mxu0 %v901
  %1094 = vmatmul.bf16.gmra.mxu0 %v462
  %v1095 = vpop.f32.mrf.mxu0
  %v1096 = vadd.f32 %v1047, %v1095
  %v1097 = vpop.f32.mrf.mxu0
  %v1098 = vadd.f32 %v1049, %v1097
  %1099 = vmatmul.bf16.gmra.mxu0 %v471
  %v1100 = vpop.f32.mrf.mxu0
  %v1101 = vadd.f32 %v1052, %v1100
  %v1102 = vpop.f32.mrf.mxu0
  %v1103 = vadd.f32 %v1054, %v1102
  %1104 = vmatmul.bf16.gmra.mxu0 %v480
  %v1105 = vpop.f32.mrf.mxu0
  %v1106 = vadd.f32 %v1057, %v1105
  %v1107 = vpop.f32.mrf.mxu0
  %v1108 = vadd.f32 %v1059, %v1107
  %1109 = vmatmul.bf16.gmra.mxu0 %v489
  %v1110 = vpop.f32.mrf.mxu0
  %v1111 = vadd.f32 %v1062, %v1110
  %v1112 = vpop.f32.mrf.mxu0
  %v1113 = vadd.f32 %v1064, %v1112
  %1114 = vmatmul.bf16.gmra.mxu0 %v498
  %v1115 = vpop.f32.mrf.mxu0
  %v1116 = vadd.f32 %v1067, %v1115
  %v1117 = vpop.f32.mrf.mxu0
  %v1118 = vadd.f32 %v1069, %v1117
  %1119 = vmatmul.bf16.gmra.mxu0 %v507
  %v1120 = vpop.f32.mrf.mxu0
  %v1121 = vadd.f32 %v1072, %v1120
  %v1122 = vpop.f32.mrf.mxu0
  %v1123 = vadd.f32 %v1074, %v1122
  %1124 = vmatmul.bf16.gmra.mxu0 %v516
  %v1125 = vpop.f32.mrf.mxu0
  %v1126 = vadd.f32 %v1077, %v1125
  %v1127 = vpop.f32.mrf.mxu0
  %v1128 = vadd.f32 %v1079, %v1127
  %1129 = vmatmul.bf16.gmra.mxu0 %v525
  %v1130 = vpop.f32.mrf.mxu0
  %v1131 = vadd.f32 %v1082, %v1130
  %v1132 = vpop.f32.mrf.mxu0
  %v1133 = vadd.f32 %v1084, %v1132
  %1134 = vdwg.mxu0
  %1135 = vmatpush.bf16.msra.mxu0 %v916
  %1136 = vmatpush.bf16.msra.mxu0 %v915
  %1137 = vmatpush.bf16.msra.mxu0 %v914
  %1138 = vmatpush.bf16.msra.mxu0 %v913
  %1139 = vmatpush.bf16.msra.mxu0 %v912
  %1140 = vmatpush.bf16.msra.mxu0 %v911
  %1141 = vmatpush.bf16.msra.mxu0 %v910
  %1142 = vmatpush.bf16.msra.mxu0 %v909
  %1143 = vmatmul.bf16.gmra.mxu0 %v463
  %v1144 = vpop.f32.mrf.mxu0
  %v1145 = vadd.f32 %v1096, %v1144
  %v1146 = vpop.f32.mrf.mxu0
  %v1147 = vadd.f32 %v1098, %v1146
  %1148 = vmatmul.bf16.gmra.mxu0 %v472
  %v1149 = vpop.f32.mrf.mxu0
  %v1150 = vadd.f32 %v1101, %v1149
  %v1151 = vpop.f32.mrf.mxu0
  %v1152 = vadd.f32 %v1103, %v1151
  %1153 = vmatmul.bf16.gmra.mxu0 %v481
  %v1154 = vpop.f32.mrf.mxu0
  %v1155 = vadd.f32 %v1106, %v1154
  %v1156 = vpop.f32.mrf.mxu0
  %v1157 = vadd.f32 %v1108, %v1156
  %1158 = vmatmul.bf16.gmra.mxu0 %v490
  %v1159 = vpop.f32.mrf.mxu0
  %v1160 = vadd.f32 %v1111, %v1159
  %v1161 = vpop.f32.mrf.mxu0
  %v1162 = vadd.f32 %v1113, %v1161
  %1163 = vmatmul.bf16.gmra.mxu0 %v499
  %v1164 = vpop.f32.mrf.mxu0
  %v1165 = vadd.f32 %v1116, %v1164
  %v1166 = vpop.f32.mrf.mxu0
  %v1167 = vadd.f32 %v1118, %v1166
  %1168 = vmatmul.bf16.gmra.mxu0 %v508
  %v1169 = vpop.f32.mrf.mxu0
  %v1170 = vadd.f32 %v1121, %v1169
  %v1171 = vpop.f32.mrf.mxu0
  %v1172 = vadd.f32 %v1123, %v1171
  %1173 = vmatmul.bf16.gmra.mxu0 %v517
  %v1174 = vpop.f32.mrf.mxu0
  %v1175 = vadd.f32 %v1126, %v1174
  %v1176 = vpop.f32.mrf.mxu0
  %v1177 = vadd.f32 %v1128, %v1176
  %1178 = vmatmul.bf16.gmra.mxu0 %v526
  %v1179 = vpop.f32.mrf.mxu0
  %v1180 = vadd.f32 %v1131, %v1179
  %v1181 = vpop.f32.mrf.mxu0
  %v1182 = vadd.f32 %v1133, %v1181
  %1183 = vdwg.mxu0
  %1184 = vmatpush.bf16.msra.mxu0 %v924
  %1185 = vmatpush.bf16.msra.mxu0 %v923
  %1186 = vmatpush.bf16.msra.mxu0 %v922
  %1187 = vmatpush.bf16.msra.mxu0 %v921
  %1188 = vmatpush.bf16.msra.mxu0 %v920
  %1189 = vmatpush.bf16.msra.mxu0 %v919
  %1190 = vmatpush.bf16.msra.mxu0 %v918
  %1191 = vmatpush.bf16.msra.mxu0 %v917
  %1192 = vmatmul.bf16.gmra.mxu0 %v464
  %v1193 = vpop.f32.mrf.mxu0
  %v1194 = vadd.f32 %v1145, %v1193
  %v1195 = vpop.f32.mrf.mxu0
  %v1196 = vadd.f32 %v1147, %v1195
  %1197 = vmatmul.bf16.gmra.mxu0 %v473
  %v1198 = vpop.f32.mrf.mxu0
  %v1199 = vadd.f32 %v1150, %v1198
  %v1200 = vpop.f32.mrf.mxu0
  %v1201 = vadd.f32 %v1152, %v1200
  %1202 = vmatmul.bf16.gmra.mxu0 %v482
  %v1203 = vpop.f32.mrf.mxu0
  %v1204 = vadd.f32 %v1155, %v1203
  %v1205 = vpop.f32.mrf.mxu0
  %v1206 = vadd.f32 %v1157, %v1205
  %1207 = vmatmul.bf16.gmra.mxu0 %v491
  %v1208 = vpop.f32.mrf.mxu0
  %v1209 = vadd.f32 %v1160, %v1208
  %v1210 = vpop.f32.mrf.mxu0
  %v1211 = vadd.f32 %v1162, %v1210
  %1212 = vmatmul.bf16.gmra.mxu0 %v500
  %v1213 = vpop.f32.mrf.mxu0
  %v1214 = vadd.f32 %v1165, %v1213
  %v1215 = vpop.f32.mrf.mxu0
  %v1216 = vadd.f32 %v1167, %v1215
  %1217 = vmatmul.bf16.gmra.mxu0 %v509
  %v1218 = vpop.f32.mrf.mxu0
  %v1219 = vadd.f32 %v1170, %v1218
  %v1220 = vpop.f32.mrf.mxu0
  %v1221 = vadd.f32 %v1172, %v1220
  %1222 = vmatmul.bf16.gmra.mxu0 %v518
  %v1223 = vpop.f32.mrf.mxu0
  %v1224 = vadd.f32 %v1175, %v1223
  %v1225 = vpop.f32.mrf.mxu0
  %v1226 = vadd.f32 %v1177, %v1225
  %1227 = vmatmul.bf16.gmra.mxu0 %v527
  %v1228 = vpop.f32.mrf.mxu0
  %v1229 = vadd.f32 %v1180, %v1228
  %v1230 = vpop.f32.mrf.mxu0
  %v1231 = vadd.f32 %v1182, %v1230
  %1232 = vdwg.mxu0
  %1233 = vmatpush.bf16.msra.mxu0 %v932
  %1234 = vmatpush.bf16.msra.mxu0 %v931
  %1235 = vmatpush.bf16.msra.mxu0 %v930
  %1236 = vmatpush.bf16.msra.mxu0 %v929
  %1237 = vmatpush.bf16.msra.mxu0 %v928
  %1238 = vmatpush.bf16.msra.mxu0 %v927
  %1239 = vmatpush.bf16.msra.mxu0 %v926
  %1240 = vmatpush.bf16.msra.mxu0 %v925
  %1241 = vmatmul.bf16.gmra.mxu0 %v465
  %v1242 = vpop.f32.mrf.mxu0
  %v1243 = vadd.f32 %v1194, %v1242
  %v1244 = vpop.f32.mrf.mxu0
  %v1245 = vadd.f32 %v1196, %v1244
  %1246 = vmatmul.bf16.gmra.mxu0 %v474
  %v1247 = vpop.f32.mrf.mxu0
  %v1248 = vadd.f32 %v1199, %v1247
  %v1249 = vpop.f32.mrf.mxu0
  %v1250 = vadd.f32 %v1201, %v1249
  %1251 = vmatmul.bf16.gmra.mxu0 %v483
  %v1252 = vpop.f32.mrf.mxu0
  %v1253 = vadd.f32 %v1204, %v1252
  %v1254 = vpop.f32.mrf.mxu0
  %v1255 = vadd.f32 %v1206, %v1254
  %1256 = vmatmul.bf16.gmra.mxu0 %v492
  %v1257 = vpop.f32.mrf.mxu0
  %v1258 = vadd.f32 %v1209, %v1257
  %v1259 = vpop.f32.mrf.mxu0
  %v1260 = vadd.f32 %v1211, %v1259
  %1261 = vmatmul.bf16.gmra.mxu0 %v501
  %v1262 = vpop.f32.mrf.mxu0
  %v1263 = vadd.f32 %v1214, %v1262
  %v1264 = vpop.f32.mrf.mxu0
  %v1265 = vadd.f32 %v1216, %v1264
  %1266 = vmatmul.bf16.gmra.mxu0 %v510
  %v1267 = vpop.f32.mrf.mxu0
  %v1268 = vadd.f32 %v1219, %v1267
  %v1269 = vpop.f32.mrf.mxu0
  %v1270 = vadd.f32 %v1221, %v1269
  %1271 = vmatmul.bf16.gmra.mxu0 %v519
  %v1272 = vpop.f32.mrf.mxu0
  %v1273 = vadd.f32 %v1224, %v1272
  %v1274 = vpop.f32.mrf.mxu0
  %v1275 = vadd.f32 %v1226, %v1274
  %1276 = vmatmul.bf16.gmra.mxu0 %v528
  %v1277 = vpop.f32.mrf.mxu0
  %v1278 = vadd.f32 %v1229, %v1277
  %v1279 = vpop.f32.mrf.mxu0
  %v1280 = vadd.f32 %v1231, %v1279
  %1281 = vdwg.mxu0
  %1282 = vmatpush.bf16.msra.mxu0 %v940
  %1283 = vmatpush.bf16.msra.mxu0 %v939
  %1284 = vmatpush.bf16.msra.mxu0 %v938
  %1285 = vmatpush.bf16.msra.mxu0 %v937
  %1286 = vmatpush.bf16.msra.mxu0 %v936
  %1287 = vmatpush.bf16.msra.mxu0 %v935
  %1288 = vmatpush.bf16.msra.mxu0 %v934
  %1289 = vmatpush.bf16.msra.mxu0 %v933
  %1290 = vmatmul.bf16.gmra.mxu0 %v466
  %v1291 = vpop.f32.mrf.mxu0
  %v1292 = vadd.f32 %v1243, %v1291
  %v1293 = vpop.f32.mrf.mxu0
  %v1294 = vadd.f32 %v1245, %v1293
  %1295 = vmatmul.bf16.gmra.mxu0 %v475
  %v1296 = vpop.f32.mrf.mxu0
  %v1297 = vadd.f32 %v1248, %v1296
  %v1298 = vpop.f32.mrf.mxu0
  %v1299 = vadd.f32 %v1250, %v1298
  %1300 = vmatmul.bf16.gmra.mxu0 %v484
  %v1301 = vpop.f32.mrf.mxu0
  %v1302 = vadd.f32 %v1253, %v1301
  %v1303 = vpop.f32.mrf.mxu0
  %v1304 = vadd.f32 %v1255, %v1303
  %1305 = vmatmul.bf16.gmra.mxu0 %v493
  %v1306 = vpop.f32.mrf.mxu0
  %v1307 = vadd.f32 %v1258, %v1306
  %v1308 = vpop.f32.mrf.mxu0
  %v1309 = vadd.f32 %v1260, %v1308
  %1310 = vmatmul.bf16.gmra.mxu0 %v502
  %v1311 = vpop.f32.mrf.mxu0
  %v1312 = vadd.f32 %v1263, %v1311
  %v1313 = vpop.f32.mrf.mxu0
  %v1314 = vadd.f32 %v1265, %v1313
  %1315 = vmatmul.bf16.gmra.mxu0 %v511
  %v1316 = vpop.f32.mrf.mxu0
  %v1317 = vadd.f32 %v1268, %v1316
  %v1318 = vpop.f32.mrf.mxu0
  %v1319 = vadd.f32 %v1270, %v1318
  %1320 = vmatmul.bf16.gmra.mxu0 %v520
  %v1321 = vpop.f32.mrf.mxu0
  %v1322 = vadd.f32 %v1273, %v1321
  %v1323 = vpop.f32.mrf.mxu0
  %v1324 = vadd.f32 %v1275, %v1323
  %1325 = vmatmul.bf16.gmra.mxu0 %v529
  %v1326 = vpop.f32.mrf.mxu0
  %v1327 = vadd.f32 %v1278, %v1326
  %v1328 = vpop.f32.mrf.mxu0
  %v1329 = vadd.f32 %v1280, %v1328
  %1330 = vdwg.mxu0
  %1331 = vmatpush.bf16.msra.mxu0 %v948
  %1332 = vmatpush.bf16.msra.mxu0 %v947
  %1333 = vmatpush.bf16.msra.mxu0 %v946
  %1334 = vmatpush.bf16.msra.mxu0 %v945
  %1335 = vmatpush.bf16.msra.mxu0 %v944
  %1336 = vmatpush.bf16.msra.mxu0 %v943
  %1337 = vmatpush.bf16.msra.mxu0 %v942
  %1338 = vmatpush.bf16.msra.mxu0 %v941
  %1339 = vmatmul.bf16.gmra.mxu0 %v467
  %v1340 = vpop.f32.mrf.mxu0
  %v1341 = vadd.f32 %v1292, %v1340
  %v1342 = vpop.f32.mrf.mxu0
  %v1343 = vadd.f32 %v1294, %v1342
  %1344 = vmatmul.bf16.gmra.mxu0 %v476
  %v1345 = vpop.f32.mrf.mxu0
  %v1346 = vadd.f32 %v1297, %v1345
  %v1347 = vpop.f32.mrf.mxu0
  %v1348 = vadd.f32 %v1299, %v1347
  %1349 = vmatmul.bf16.gmra.mxu0 %v485
  %v1350 = vpop.f32.mrf.mxu0
  %v1351 = vadd.f32 %v1302, %v1350
  %v1352 = vpop.f32.mrf.mxu0
  %v1353 = vadd.f32 %v1304, %v1352
  %1354 = vmatmul.bf16.gmra.mxu0 %v494
  %v1355 = vpop.f32.mrf.mxu0
  %v1356 = vadd.f32 %v1307, %v1355
  %v1357 = vpop.f32.mrf.mxu0
  %v1358 = vadd.f32 %v1309, %v1357
  %1359 = vmatmul.bf16.gmra.mxu0 %v503
  %v1360 = vpop.f32.mrf.mxu0
  %v1361 = vadd.f32 %v1312, %v1360
  %v1362 = vpop.f32.mrf.mxu0
  %v1363 = vadd.f32 %v1314, %v1362
  %1364 = vmatmul.bf16.gmra.mxu0 %v512
  %v1365 = vpop.f32.mrf.mxu0
  %v1366 = vadd.f32 %v1317, %v1365
  %v1367 = vpop.f32.mrf.mxu0
  %v1368 = vadd.f32 %v1319, %v1367
  %1369 = vmatmul.bf16.gmra.mxu0 %v521
  %v1370 = vpop.f32.mrf.mxu0
  %v1371 = vadd.f32 %v1322, %v1370
  %v1372 = vpop.f32.mrf.mxu0
  %v1373 = vadd.f32 %v1324, %v1372
  %1374 = vmatmul.bf16.gmra.mxu0 %v530
  %v1375 = vpop.f32.mrf.mxu0
  %v1376 = vadd.f32 %v1327, %v1375
  %v1377 = vpop.f32.mrf.mxu0
  %v1378 = vadd.f32 %v1329, %v1377
  %1379 = vdwg.mxu0
  %1380 = vmatpush.bf16.msra.mxu0 %v956
  %1381 = vmatpush.bf16.msra.mxu0 %v955
  %1382 = vmatpush.bf16.msra.mxu0 %v954
  %1383 = vmatpush.bf16.msra.mxu0 %v953
  %1384 = vmatpush.bf16.msra.mxu0 %v952
  %1385 = vmatpush.bf16.msra.mxu0 %v951
  %1386 = vmatpush.bf16.msra.mxu0 %v950
  %1387 = vmatpush.bf16.msra.mxu0 %v949
  %1388 = vmatmul.bf16.gmra.mxu0 %v468
  %v1389 = vpop.f32.mrf.mxu0
  %v1390 = vadd.f32 %v1341, %v1389
  %v1391 = vpop.f32.mrf.mxu0
  %v1392 = vadd.f32 %v1343, %v1391
  %1393 = vmatmul.bf16.gmra.mxu0 %v477
  %v1394 = vpop.f32.mrf.mxu0
  %v1395 = vadd.f32 %v1346, %v1394
  %v1396 = vpop.f32.mrf.mxu0
  %v1397 = vadd.f32 %v1348, %v1396
  %1398 = vmatmul.bf16.gmra.mxu0 %v486
  %v1399 = vpop.f32.mrf.mxu0
  %v1400 = vadd.f32 %v1351, %v1399
  %v1401 = vpop.f32.mrf.mxu0
  %v1402 = vadd.f32 %v1353, %v1401
  %1403 = vmatmul.bf16.gmra.mxu0 %v495
  %v1404 = vpop.f32.mrf.mxu0
  %v1405 = vadd.f32 %v1356, %v1404
  %v1406 = vpop.f32.mrf.mxu0
  %v1407 = vadd.f32 %v1358, %v1406
  %1408 = vmatmul.bf16.gmra.mxu0 %v504
  %v1409 = vpop.f32.mrf.mxu0
  %v1410 = vadd.f32 %v1361, %v1409
  %v1411 = vpop.f32.mrf.mxu0
  %v1412 = vadd.f32 %v1363, %v1411
  %1413 = vmatmul.bf16.gmra.mxu0 %v513
  %v1414 = vpop.f32.mrf.mxu0
  %v1415 = vadd.f32 %v1366, %v1414
  %v1416 = vpop.f32.mrf.mxu0
  %v1417 = vadd.f32 %v1368, %v1416
  %1418 = vmatmul.bf16.gmra.mxu0 %v522
  %v1419 = vpop.f32.mrf.mxu0
  %v1420 = vadd.f32 %v1371, %v1419
  %v1421 = vpop.f32.mrf.mxu0
  %v1422 = vadd.f32 %v1373, %v1421
  %1423 = vmatmul.bf16.gmra.mxu0 %v531
  %v1424 = vpop.f32.mrf.mxu0
  %v1425 = vadd.f32 %v1376, %v1424
  %v1426 = vpop.f32.mrf.mxu0
  %v1427 = vadd.f32 %v1378, %v1426
  %1428 = vdwg.mxu0
  %1429 = vmatpush.bf16.msra.mxu0 %v964
  %1430 = vmatpush.bf16.msra.mxu0 %v963
  %1431 = vmatpush.bf16.msra.mxu0 %v962
  %1432 = vmatpush.bf16.msra.mxu0 %v961
  %1433 = vmatpush.bf16.msra.mxu0 %v960
  %1434 = vmatpush.bf16.msra.mxu0 %v959
  %1435 = vmatpush.bf16.msra.mxu0 %v958
  %1436 = vmatpush.bf16.msra.mxu0 %v957
  %1437 = vmatmul.bf16.gmra.mxu0 %v469
  %v1438 = vpop.f32.mrf.mxu0
  %v1439 = vadd.f32 %v1390, %v1438
  %v1440 = vpop.f32.mrf.mxu0
  %v1441 = vadd.f32 %v1392, %v1440
  %1442 = vmatmul.bf16.gmra.mxu0 %v478
  %v1443 = vpop.f32.mrf.mxu0
  %v1444 = vadd.f32 %v1395, %v1443
  %v1445 = vpop.f32.mrf.mxu0
  %v1446 = vadd.f32 %v1397, %v1445
  %1447 = vmatmul.bf16.gmra.mxu0 %v487
  %v1448 = vpop.f32.mrf.mxu0
  %v1449 = vadd.f32 %v1400, %v1448
  %v1450 = vpop.f32.mrf.mxu0
  %v1451 = vadd.f32 %v1402, %v1450
  %1452 = vmatmul.bf16.gmra.mxu0 %v496
  %v1453 = vpop.f32.mrf.mxu0
  %v1454 = vadd.f32 %v1405, %v1453
  %v1455 = vpop.f32.mrf.mxu0
  %v1456 = vadd.f32 %v1407, %v1455
  %1457 = vmatmul.bf16.gmra.mxu0 %v505
  %v1458 = vpop.f32.mrf.mxu0
  %v1459 = vadd.f32 %v1410, %v1458
  %v1460 = vpop.f32.mrf.mxu0
  %v1461 = vadd.f32 %v1412, %v1460
  %1462 = vmatmul.bf16.gmra.mxu0 %v514
  %v1463 = vpop.f32.mrf.mxu0
  %v1464 = vadd.f32 %v1415, %v1463
  %v1465 = vpop.f32.mrf.mxu0
  %v1466 = vadd.f32 %v1417, %v1465
  %1467 = vmatmul.bf16.gmra.mxu0 %v523
  %v1468 = vpop.f32.mrf.mxu0
  %v1469 = vadd.f32 %v1420, %v1468
  %v1470 = vpop.f32.mrf.mxu0
  %v1471 = vadd.f32 %v1422, %v1470
  %1472 = vmatmul.bf16.gmra.mxu0 %v532
  %v1473 = vpop.f32.mrf.mxu0
  %v1474 = vadd.f32 %v1425, %v1473
  %v1475 = vpop.f32.mrf.mxu0
  %v1476 = vadd.f32 %v1427, %v1475
  %1477 = vdwg.mxu0
  %1478 = vst [vmem:[%s2] sm:$0xff] %v1439
  %1479 = vst [vmem:[%s2 + $0x8] sm:$0xff] %v1441
  %1480 = vst [vmem:[%s2 + $0x10] sm:$0xff] %v1444
  %1481 = vst [vmem:[%s2 + $0x18] sm:$0xff] %v1446
  %1482 = vst [vmem:[%s2 + $0x20] sm:$0xff] %v1449
  %1483 = vst [vmem:[%s2 + $0x28] sm:$0xff] %v1451
  %1484 = vst [vmem:[%s2 + $0x30] sm:$0xff] %v1454
  %1485 = vst [vmem:[%s2 + $0x38] sm:$0xff] %v1456
  %1486 = vst [vmem:[%s2 + $0x40] sm:$0xff] %v1459
  %1487 = vst [vmem:[%s2 + $0x48] sm:$0xff] %v1461
  %1488 = vst [vmem:[%s2 + $0x50] sm:$0xff] %v1464
  %1489 = vst [vmem:[%s2 + $0x58] sm:$0xff] %v1466
  %1490 = vst [vmem:[%s2 + $0x60] sm:$0xff] %v1469
  %1491 = vst [vmem:[%s2 + $0x68] sm:$0xff] %v1471
  %1492 = vst [vmem:[%s2 + $0x70] sm:$0xff] %v1474
  %1493 = vst [vmem:[%s2 + $0x78] sm:$0xff] %v1476
  %v1494 = vadd.f32 %v1439, %v1441
  %v1495 = vadd.f32 %v1494, %v1444
  %v1496 = vadd.f32 %v1495, %v1446
  %v1497 = vadd.f32 %v1496, %v1449
  %v1498 = vadd.f32 %v1497, %v1451
  %v1499 = vadd.f32 %v1498, %v1454
  %v1500 = vadd.f32 %v1499, %v1456
  %v1501 = vadd.f32 %v1500, %v1459
  %v1502 = vadd.f32 %v1501, %v1461
  %v1503 = vadd.f32 %v1502, %v1464
  %v1504 = vadd.f32 %v1503, %v1466
  %v1505 = vadd.f32 %v1504, %v1469
  %v1506 = vadd.f32 %v1505, %v1471
  %v1507 = vadd.f32 %v1506, %v1474
  %v1508 = vadd.f32 %v1507, %v1476
  %v1509 = vrot.slane %v1508, 4
  %v1510 = vadd.f32 %v1508, %v1509
  %v1511 = vrot.slane %v1510, 2
  %v1512 = vadd.f32 %v1510, %v1511
  %v1513 = vrot.slane %v1512, 1
  %v1514 = vadd.f32 %v1512, %v1513
  %v1515 = vmul.f32 %v1439, %v1439
  %v1516 = vmul.f32 %v1441, %v1441
  %v1517 = vmul.f32 %v1444, %v1444
  %v1518 = vmul.f32 %v1446, %v1446
  %v1519 = vmul.f32 %v1449, %v1449
  %v1520 = vmul.f32 %v1451, %v1451
  %v1521 = vmul.f32 %v1454, %v1454
  %v1522 = vmul.f32 %v1456, %v1456
  %v1523 = vmul.f32 %v1459, %v1459
  %v1524 = vmul.f32 %v1461, %v1461
  %v1525 = vmul.f32 %v1464, %v1464
  %v1526 = vmul.f32 %v1466, %v1466
  %v1527 = vmul.f32 %v1469, %v1469
  %v1528 = vmul.f32 %v1471, %v1471
  %v1529 = vmul.f32 %v1474, %v1474
  %v1530 = vmul.f32 %v1476, %v1476
  %v1531 = vadd.f32 %v1515, %v1516
  %v1532 = vadd.f32 %v1531, %v1517
  %v1533 = vadd.f32 %v1532, %v1518
  %v1534 = vadd.f32 %v1533, %v1519
  %v1535 = vadd.f32 %v1534, %v1520
  %v1536 = vadd.f32 %v1535, %v1521
  %v1537 = vadd.f32 %v1536, %v1522
  %v1538 = vadd.f32 %v1537, %v1523
  %v1539 = vadd.f32 %v1538, %v1524
  %v1540 = vadd.f32 %v1539, %v1525
  %v1541 = vadd.f32 %v1540, %v1526
  %v1542 = vadd.f32 %v1541, %v1527
  %v1543 = vadd.f32 %v1542, %v1528
  %v1544 = vadd.f32 %v1543, %v1529
  %v1545 = vadd.f32 %v1544, %v1530
  %v1546 = vrot.slane %v1545, 4
  %v1547 = vadd.f32 %v1545, %v1546
  %v1548 = vrot.slane %v1547, 2
  %v1549 = vadd.f32 %v1547, %v1548
  %v1550 = vrot.slane %v1549, 1
  %v1551 = vadd.f32 %v1549, %v1550
  %v1552 = vlaneseq
  %v1553 = vshrl.u32 %v1552, 7
  %vm1554 = vcmp.eq.s32.totalorder %v1553, 0
  %vm1555 = vcmp.eq.s32.totalorder %v1553, 1
  %v1556 = vsel %vm1555, %v1551, 0.0
  %v1557 = vsel %vm1554, %v1514, %v1556
  %1558 = vst [vmem:[%s3] sm:$0xff] %v1557
  // Predicated region
  $region10: #{residual_block.7} parent=0 // pred_check
    _
  $region11: #{residual_block.7} parent=0 // pred_check_branch
    %1560 = sbr.rel (0) target = $region13
  $region12: #{residual_block.7} parent=0 // pred_region
    _
  $region13: #{residual_block.7} parent=0 // pred_fallthru
    _
  // Predicated region
  $region14: #{residual_block.7} parent=0 // pred_check
    _
  $region15: #{residual_block.7} parent=0 // pred_check_branch
    %1562 = sbr.rel (0) target = $region17
  $region16: #{residual_block.7} parent=0 // pred_region
    _
  $region17: #{residual_block.7} parent=0 // pred_fallthru
    _
  // Predicated region
  $region18: #{residual_block.7} parent=0 // pred_check
    _
  $region19: #{residual_block.7} parent=0 // pred_check_branch
    %1564 = sbr.rel (0) target = $region21
  $region20: #{residual_block.7} parent=0 // pred_region
    _
  $region21: #{residual_block.7} parent=0 // pred_fallthru
    _
  // Predicated region
  $region22: #{residual_block.7} parent=0 // pred_check
    _
  $region23: #{residual_block.7} parent=0 // pred_check_branch
    %1566 = sbr.rel (0) target = $region25
  $region24: #{residual_block.7} parent=0 // pred_region
    _
  $region25: #{residual_block.7} parent=0 // pred_fallthru
    _

</llo_original>
